<compile_context>
chip_gen: v6e
topology: v6e:2x2x1
jax: 0.10.0
libtpu: 0.0.40
codegen_flags: <defaults>
</compile_context>

<pallas_src>
import functools

import jax
import jax.numpy as jnp
from jax import lax
from jax.experimental import pallas as pl
from jax.experimental.pallas import tpu as pltpu


# ----------------------------------------------------------------------------
# Helpers
# ----------------------------------------------------------------------------
def _round_up(x, m):
    return ((x + m - 1) // m) * m


def _pick_tile(dim, max_tile, mult):
    """Pick a tile (multiple of `mult`, <= max_tile).

    If the whole (rounded-up) dimension fits under max_tile, use it as a single tile
    (e.g. K=576 -> 640 in one reduction step instead of 5).  Otherwise minimize padding,
    preferring bigger tiles."""
    r = _round_up(dim, mult)
    if r <= max_tile:
        return r
    best, best_pad = mult, r
    for t in range(2 * mult, max_tile + 1, mult):
        p = _round_up(dim, t)
        if p < best_pad or (p == best_pad and t > best):
            best, best_pad = t, p
    return best


# ----------------------------------------------------------------------------
# Pallas kernels
# ----------------------------------------------------------------------------
def _matmul_kernel(a_ref, b_ref, o_ref, acc_ref):
    @pl.when(pl.program_id(2) == 0)
    def _():
        acc_ref[...] = jnp.zeros_like(acc_ref)

    acc_ref[...] += jnp.dot(a_ref[...], b_ref[...],
                            preferred_element_type=jnp.float32)

    @pl.when(pl.program_id(2) == pl.num_programs(2) - 1)
    def _():
        o_ref[...] = acc_ref[...]


def _matmul_stats_kernel(a_ref, b_ref, o_ref, s_ref, q_ref, acc_ref, s_acc, q_acc):
    """GEMM with fused BatchNorm-statistics epilogue.

    Grid is (Nj, Mi, Kk) with j outermost so the per-column-block sum / sum-of-squares
    can accumulate across all row blocks i before being written once at the end."""
    i = pl.program_id(1)
    k = pl.program_id(2)
    ni = pl.num_programs(1)
    nk = pl.num_programs(2)

    @pl.when(k == 0)
    def _():
        acc_ref[...] = jnp.zeros_like(acc_ref)

    @pl.when(jnp.logical_and(i == 0, k == 0))
    def _():
        s_acc[...] = jnp.zeros_like(s_acc)
        q_acc[...] = jnp.zeros_like(q_acc)

    acc_ref[...] += jnp.dot(a_ref[...], b_ref[...],
                            preferred_element_type=jnp.float32)

    @pl.when(k == nk - 1)
    def _():
        y = acc_ref[...]
        o_ref[...] = y
        # Padded (zero) rows / columns contribute 0 to both sums -> stats stay exact.
        s_acc[...] += jnp.sum(y, axis=0, keepdims=True)
        q_acc[...] += jnp.sum(y * y, axis=0, keepdims=True)

    @pl.when(jnp.logical_and(i == ni - 1, k == nk - 1))
    def _():
        s_ref[...] = s_acc[...]
        q_ref[...] = q_acc[...]


def pallas_matmul(a, b, max_tm=256, max_tn=512, max_tk=1024, bn_stats=False):
    """(M,K)@(K,N)->(M,N) f32; operands cast to bf16, f32 MXU accumulation.

    bn_stats=True additionally returns per-output-column sum and sum-of-squares of the
    f32 result (fused into the GEMM epilogue, saving a separate stats pass)."""
    M, K = a.shape
    K2, N = b.shape
    assert K == K2
    if M <= 64:
        # Tiny-M GEMMs (LSTM input projection, FC head, late conv layers): fewer, fatter
        # grid steps so the dominant weight read streams at HBM roofline.
        max_tm, max_tn, max_tk = 64, 2048, 1024
    a = a.astype(jnp.bfloat16)
    b = b.astype(jnp.bfloat16)
    tm = _pick_tile(M, max_tm, 16)      # bf16 sublane packing -> multiple of 16
    tn = _pick_tile(N, max_tn, 128)
    tk = _pick_tile(K, max_tk, 128)
    Mp, Kp, Np = _round_up(M, tm), _round_up(K, tk), _round_up(N, tn)
    if (Mp, Kp) != (M, K):
        a = jnp.pad(a, ((0, Mp - M), (0, Kp - K)))
    if (Kp, Np) != (K, N):
        b = jnp.pad(b, ((0, Kp - K), (0, Np - N)))

    if not bn_stats:
        out = pl.pallas_call(
            _matmul_kernel,
            out_shape=jax.ShapeDtypeStruct((Mp, Np), jnp.float32),
            grid_spec=pltpu.PrefetchScalarGridSpec(
                num_scalar_prefetch=0,
                grid=(Mp // tm, Np // tn, Kp // tk),
                in_specs=[pl.BlockSpec((tm, tk), lambda i, j, k: (i, k)),
                          pl.BlockSpec((tk, tn), lambda i, j, k: (k, j))],
                out_specs=pl.BlockSpec((tm, tn), lambda i, j, k: (i, j)),
                scratch_shapes=[pltpu.VMEM((tm, tn), jnp.float32)]),
            compiler_params=pltpu.CompilerParams(
                dimension_semantics=("parallel", "parallel", "arbitrary")),
        )(a, b)
        if (Mp, Np) != (M, N):
            out = out[:M, :N]
        return out

    out, s, q = pl.pallas_call(
        _matmul_stats_kernel,
        out_shape=(jax.ShapeDtypeStruct((Mp, Np), jnp.float32),
                   jax.ShapeDtypeStruct((1, Np), jnp.float32),
                   jax.ShapeDtypeStruct((1, Np), jnp.float32)),
        grid_spec=pltpu.PrefetchScalarGridSpec(
            num_scalar_prefetch=0,
            grid=(Np // tn, Mp // tm, Kp // tk),   # j outermost: stats accumulate over i
            in_specs=[pl.BlockSpec((tm, tk), lambda j, i, k: (i, k)),
                      pl.BlockSpec((tk, tn), lambda j, i, k: (k, j))],
            out_specs=[pl.BlockSpec((tm, tn), lambda j, i, k: (i, j)),
                       pl.BlockSpec((1, tn), lambda j, i, k: (0, j)),
                       pl.BlockSpec((1, tn), lambda j, i, k: (0, j))],
            scratch_shapes=[pltpu.VMEM((tm, tn), jnp.float32),
                            pltpu.VMEM((1, tn), jnp.float32),
                            pltpu.VMEM((1, tn), jnp.float32)]),
        compiler_params=pltpu.CompilerParams(
            dimension_semantics=("parallel", "arbitrary", "arbitrary")),
    )(a, b)
    if (Mp, Np) != (M, N):
        out = out[:M, :N]
    return out, s[0, :N], q[0, :N]


def _affine_kernel(x_ref, s_ref, b_ref, o_ref, *, relu):
    y = x_ref[...] * s_ref[...] + b_ref[...]
    if relu:
        y = jnp.maximum(y, 0.0)
    o_ref[...] = y


def _affine_res_relu_kernel(x_ref, s_ref, b_ref, r_ref, o_ref):
    o_ref[...] = jnp.maximum(x_ref[...] * s_ref[...] + b_ref[...] + r_ref[...], 0.0)


def pallas_affine(x2, scale, bias, relu=False, residual=None):
    """y = x * scale + bias (+ residual) (+ relu); x2 (R, C); lane-dense full-C tiles."""
    R, C = x2.shape
    # Bigger row tiles for narrow C (HBM roofline), capped so buffers stay ~2 MiB.
    max_rows = max(256, min(4096, ((2 * 1024 * 1024) // (4 * C)) // 8 * 8))
    tr = _pick_tile(R, max_rows, 8)
    Rp = _round_up(R, tr)
    if Rp != R:
        x2 = jnp.pad(x2, ((0, Rp - R), (0, 0)))
    sp = scale.reshape(1, C).astype(jnp.float32)
    bp = bias.reshape(1, C).astype(jnp.float32)
    in_specs = [pl.BlockSpec((tr, C), lambda i: (i, 0)),
                pl.BlockSpec((1, C), lambda i: (0, 0)),
                pl.BlockSpec((1, C), lambda i: (0, 0))]
    args = [x2, sp, bp]
    if residual is not None:
        if Rp != R:
            residual = jnp.pad(residual, ((0, Rp - R), (0, 0)))
        in_specs.append(pl.BlockSpec((tr, C), lambda i: (i, 0)))
        args.append(residual)
        kernel = _affine_res_relu_kernel
    else:
        kernel = functools.partial(_affine_kernel, relu=relu)
    out = pl.pallas_call(
        kernel,
        out_shape=jax.ShapeDtypeStruct((Rp, C), jnp.float32),
        grid_spec=pltpu.PrefetchScalarGridSpec(
            num_scalar_prefetch=0,
            grid=(Rp // tr,),
            in_specs=in_specs,
            out_specs=pl.BlockSpec((tr, C), lambda i: (i, 0))),
        compiler_params=pltpu.CompilerParams(
            dimension_semantics=("parallel",),
            vmem_limit_bytes=32 * 1024 * 1024),
    )(*args)
    if Rp != R:
        out = out[:R]
    return out


def _lstm_scan_kernel(gx_ref, whh_hbm, hs_ref, whh_vmem, h_sc, c_sc, sem, *,
                      H, T, n_chunks, emit_all):
    """One timestep per grid iteration.

    W_hh is stored as n_chunks (H,H) bf16 gate chunks.  At t==0 the hidden state is zero,
    so the recurrent matmul is skipped and all chunk DMAs are merely started; they are
    waited chunk-by-chunk at t==1 (overlapping the remaining transfer with the partial
    dots of earlier chunks).  h/c stay resident in VMEM scratch; with emit_all=False only
    the final hidden state is written back to HBM."""
    t = pl.program_id(0)

    def cell(gi, gf, gg, go, first=False):
        i_t = jax.nn.sigmoid(gi)
        f_t = jax.nn.sigmoid(gf)
        g_t = jnp.tanh(gg)
        o_t = jax.nn.sigmoid(go)
        if first:
            c_new = i_t * g_t                       # c_0 == 0
        else:
            c_new = f_t * c_sc[...] + i_t * g_t
        h_new = o_t * jnp.tanh(c_new)
        c_sc[...] = c_new
        h_sc[...] = h_new
        if emit_all:
            hs_ref[0] = h_new
        else:
            @pl.when(t == T - 1)
            def _():
                hs_ref[0] = h_new

    @pl.when(t == 0)
    def _():
        if T > 1:
            # Prefetch W_hh; it is not needed this step (h_0 == 0 -> recurrent term == 0).
            for kk in range(n_chunks):
                pltpu.make_async_copy(whh_hbm.at[kk], whh_vmem.at[kk],
                                      sem.at[kk]).start()
        gx = gx_ref[0]
        cell(gx[:, 0:H], gx[:, H:2 * H], gx[:, 2 * H:3 * H], gx[:, 3 * H:4 * H],
             first=True)

    @pl.when(t > 0)
    def _():
        hb = h_sc[...].astype(jnp.bfloat16)
        gx = gx_ref[0]
        gparts = []
        for kk in range(n_chunks):
            @pl.when(t == 1)
            def _wait(kk=kk):
                pltpu.make_async_copy(whh_hbm.at[kk], whh_vmem.at[kk],
                                      sem.at[kk]).wait()
            gparts.append(gx[:, kk * H:(kk + 1) * H] +
                          jnp.dot(hb, whh_vmem[kk],
                                  preferred_element_type=jnp.float32))
        cell(*gparts)


def pallas_lstm_scan(gx, whh_chunks_bf16, H, emit_all=True):
    """gx: (T, Bp, 4H) precomputed input gates (incl. biases).
    whh_chunks_bf16: (4, H, H) bf16, chunk k = W_hh[k*H:(k+1)*H, :]^T (gate order i,f,g,o).
    Returns (T, Bp, H) if emit_all else (1, Bp, H) holding only h_{T-1}."""
    T, Bp, _ = gx.shape
    n_chunks = whh_chunks_bf16.shape[0]
    assert n_chunks == 4 and whh_chunks_bf16.shape[1:] == (H, H)
    out_T = T if emit_all else 1
    out_map = (lambda t: (t, 0, 0)) if emit_all else (lambda t: (0, 0, 0))
    # TODO(synk): int8 (v5e/v6e) or fp8 (v7x) quantized resident W_hh with per-column
    # scales would halve the vld-bound per-step weight stream and the 32 MiB residency.
    # TODO(synk): on v7x, split the 4H gate dimension across the two TensorCores
    # (core_map + VMEM_SHARED exchange) to use both cores on the sequential recurrence.
    return pl.pallas_call(
        functools.partial(_lstm_scan_kernel, H=H, T=T, n_chunks=n_chunks,
                          emit_all=emit_all),
        out_shape=jax.ShapeDtypeStruct((out_T, Bp, H), jnp.float32),
        grid_spec=pltpu.PrefetchScalarGridSpec(
            num_scalar_prefetch=0,
            grid=(T,),
            in_specs=[pl.BlockSpec((1, Bp, 4 * H), lambda t: (t, 0, 0)),
                      pl.BlockSpec(memory_space=pl.ANY)],
            out_specs=pl.BlockSpec((1, Bp, H), out_map),
            scratch_shapes=[pltpu.VMEM((n_chunks, H, H), jnp.bfloat16),  # resident W_hh
                            pltpu.VMEM((Bp, H), jnp.float32),            # h state
                            pltpu.VMEM((Bp, H), jnp.float32),            # c state
                            pltpu.SemaphoreType.DMA((n_chunks,))]),
        compiler_params=pltpu.CompilerParams(
            dimension_semantics=("arbitrary",),
            vmem_limit_bytes=48 * 1024 * 1024),
    )(gx, whh_chunks_bf16)


# ----------------------------------------------------------------------------
# Layers built on the kernels (glue: im2col / padding / reshapes in plain JAX)
# ----------------------------------------------------------------------------
def conv2d_bn(x, w, stride, pad):
    """x: NHWC, w: PyTorch layout (Cout, Cin, kh, kw).  im2col (bf16) + Pallas GEMM with
    fused BN-statistics epilogue.  Returns (y_nhwc_f32, col_sum, col_sumsq)."""
    N, H, W, Cin = x.shape
    Cout, _, kh, kw = w.shape
    x = x.astype(jnp.bfloat16)
    if pad:
        x = jnp.pad(x, ((0, 0), (pad, pad), (pad, pad), (0, 0)))
    Ho = (H + 2 * pad - kh) // stride + 1
    Wo = (W + 2 * pad - kw) // stride + 1
    K = kh * kw * Cin
    if kh == 1 and kw == 1:
        a = x[:, ::stride, ::stride, :][:, :Ho, :Wo, :].reshape(N * Ho * Wo, K)
        Kp = K
    else:
        # TODO(synk): im2col still materializes the kh*kw-expanded patches in HBM (bf16);
        # a fused window-gather conv kernel (x in pl.ANY + manual DMA) would remove it.
        cols = []
        for i in range(kh):
            for j in range(kw):
                cols.append(x[:, i:i + stride * (Ho - 1) + 1:stride,
                               j:j + stride * (Wo - 1) + 1:stride, :])
        Kp = _round_up(K, 128)
        if Kp != K:
            # Fold the GEMM K-padding into the single im2col materialization.
            cols.append(jnp.zeros((N, Ho, Wo, Kp - K), jnp.bfloat16))
        a = jnp.concatenate(cols, axis=-1).reshape(N * Ho * Wo, Kp)
    wt = jnp.transpose(w, (2, 3, 1, 0)).reshape(K, Cout).astype(jnp.bfloat16)
    if Kp != K:
        wt = jnp.pad(wt, ((0, Kp - K), (0, 0)))
    y, s, q = pallas_matmul(a, wt, bn_stats=True)
    return y.reshape(N, Ho, Wo, Cout), s, q


def batchnorm_act(y, col_sum, col_sq, gamma, beta, relu=True, residual=None, eps=1e-5):
    """Training-mode BatchNorm2d (batch statistics from the fused GEMM epilogue) +
    optional residual add + ReLU, as one lane-dense elementwise Pallas pass."""
    N, H, W, C = y.shape
    R = N * H * W
    mean = col_sum / R
    var = col_sq / R - mean * mean          # biased variance (PyTorch normalization)
    scale = gamma * lax.rsqrt(var + eps)
    bias = beta - mean * scale
    x2 = y.reshape(R, C)
    res2 = residual.reshape(R, C) if residual is not None else None
    # Lane-dense folding for narrow channel counts (C=64 -> 128 lanes).
    if C < 128 and 128 % C == 0 and R % (128 // C) == 0:
        fold = 128 // C
        x2 = x2.reshape(R // fold, C * fold)
        if res2 is not None:
            res2 = res2.reshape(R // fold, C * fold)
        scale = jnp.tile(scale, fold)
        bias = jnp.tile(bias, fold)
    out = pallas_affine(x2, scale, bias, relu=relu, residual=res2)
    return out.reshape(N, H, W, C)


def maxpool3x3_s2(x):
    # TODO(synk): window pooling done with lax.reduce_window (plain JAX glue).
    return lax.reduce_window(x, -jnp.inf, lax.max, (1, 3, 3, 1), (1, 2, 2, 1),
                             padding=((0, 0), (1, 1), (1, 1), (0, 0)))


def avgpool7_s1_p2(x):
    # AvgPool2d(7, stride=1, padding=2), count_include_pad=True -> divide by 49.
    s = lax.reduce_window(x, 0.0, lax.add, (1, 7, 7, 1), (1, 1, 1, 1),
                          padding=((0, 0), (2, 2), (2, 2), (0, 0)))
    return s / 49.0


def bottleneck_forward(x, p):
    identity = x
    out, s, q = conv2d_bn(x, p["conv1_w"], 1, 0)
    out = batchnorm_act(out, s, q, p["bn1_g"], p["bn1_b"], relu=True)
    out, s, q = conv2d_bn(out, p["conv2_w"], p["stride"], 1)
    out = batchnorm_act(out, s, q, p["bn2_g"], p["bn2_b"], relu=True)
    out, s3, q3 = conv2d_bn(out, p["conv3_w"], 1, 0)
    if p["ds_w"] is not None:
        identity, ds, dq = conv2d_bn(x, p["ds_w"], p["stride"], 0)
        identity = batchnorm_act(identity, ds, dq, p["ds_g"], p["ds_b"], relu=False)
    # TODO(synk): the BN affine could be fused into the consumer conv's A-tile load.
    return batchnorm_act(out, s3, q3, p["bn3_g"], p["bn3_b"], residual=identity)


def lstm_forward(x_seq, lstm_params, hidden):
    """PyTorch nn.LSTM (batch_first), gate order (i, f, g, o).  Returns h of last step.

    Input projection (X @ W_ih^T + b) is hoisted out of the time loop into one GEMM per
    layer; the recurrence runs in a single fused Pallas scan with W_hh resident in VMEM."""
    B, T, _ = x_seq.shape
    Bp = _round_up(B, 8)
    out = x_seq
    h_last = None
    n_layers = len(lstm_params)
    for li, lp in enumerate(lstm_params):
        last = (li == n_layers - 1)
        in_sz = out.shape[-1]
        gx = pallas_matmul(out.reshape(B * T, in_sz), lp["w_ih"].T)      # (B*T, 4H)
        gx = gx + (lp["b_ih"] + lp["b_hh"])[None, :]
        gx = gx.reshape(B, T, 4 * hidden).transpose(1, 0, 2)             # (T, B, 4H)
        if Bp != B:
            # Padded batch rows carry zero gates -> finite h/c; sliced away below.
            gx = jnp.pad(gx, ((0, 0), (0, Bp - B), (0, 0)))
        # (4, H, H) gate chunks of W_hh^T; transpose + bf16 cast fuse into one XLA pass.
        whh_chunks = jnp.transpose(lp["w_hh"].reshape(4, hidden, hidden),
                                   (0, 2, 1)).astype(jnp.bfloat16)
        hs = pallas_lstm_scan(gx, whh_chunks, hidden, emit_all=not last)
        if last:
            h_last = hs[0, :B, :]                                        # only h_{T-1}
        else:
            out = jnp.transpose(hs[:, :B, :], (1, 0, 2))                 # (B, T, H)
    return h_last


# ----------------------------------------------------------------------------
# Parameter initialization (deterministic, mirrors module __init__ shapes)
# ----------------------------------------------------------------------------
EXPANSION = 4          # Bottleneck expansion (LSTMinputsize 2048 = 512 * 4)
LSTM_HIDDEN = 2048
LSTM_INPUT = 2048
LSTM_LAYERS = 2


def _conv_w(key, cout, cin, kh, kw):
    n = kh * kw * cout
    return jax.random.normal(key, (cout, cin, kh, kw), jnp.float32) * (2.0 / n) ** 0.5


def _make_bottleneck(key, inplanes, planes, stride, downsample):
    ks = jax.random.split(key, 4)
    p = {
        "stride": stride,
        "conv1_w": _conv_w(ks[0], planes, inplanes, 1, 1),
        "bn1_g": jnp.ones(planes), "bn1_b": jnp.zeros(planes),
        "conv2_w": _conv_w(ks[1], planes, planes, 3, 3),
        "bn2_g": jnp.ones(planes), "bn2_b": jnp.zeros(planes),
        "conv3_w": _conv_w(ks[2], planes * EXPANSION, planes, 1, 1),
        "bn3_g": jnp.ones(planes * EXPANSION), "bn3_b": jnp.zeros(planes * EXPANSION),
        "ds_w": None, "ds_g": None, "ds_b": None,
    }
    if downsample:
        p["ds_w"] = _conv_w(ks[3], planes * EXPANSION, inplanes, 1, 1)
        p["ds_g"] = jnp.ones(planes * EXPANSION)
        p["ds_b"] = jnp.zeros(planes * EXPANSION)
    return p


def _make_layer(key, inplanes, planes, blocks, stride=1):
    ks = jax.random.split(key, blocks)
    downsample = (stride != 1) or (inplanes != planes * EXPANSION)
    params = [_make_bottleneck(ks[0], inplanes, planes, stride, downsample)]
    inplanes = planes * EXPANSION
    for i in range(1, blocks):
        params.append(_make_bottleneck(ks[i], inplanes, planes, 1, False))
    return params, inplanes


def init_params(key, layers, num_classes, grayscale):
    in_dim = 1 if grayscale else 3
    keys = jax.random.split(key, 9)
    params = {}
    params["conv1_w"] = _conv_w(keys[0], 64, in_dim, 7, 7)
    params["bn1_g"] = jnp.ones(64)
    params["bn1_b"] = jnp.zeros(64)
    inplanes = 64
    params["layer1"], inplanes = _make_layer(keys[1], inplanes, 64, layers[0])
    params["layer2"], inplanes = _make_layer(keys[2], inplanes, 128, layers[1], stride=2)
    params["layer3"], inplanes = _make_layer(keys[3], inplanes, 256, layers[2], stride=2)
    params["layer4"], inplanes = _make_layer(keys[4], inplanes, 512, layers[3], stride=2)

    # LSTM: PyTorch default uniform(-1/sqrt(H), 1/sqrt(H)), gate order (i, f, g, o)
    bound = 1.0 / (LSTM_HIDDEN ** 0.5)
    lstm = []
    lk = keys[5]
    for l in range(LSTM_LAYERS):
        lk, k0, k1, k2, k3 = jax.random.split(lk, 5)
        in_sz = LSTM_INPUT if l == 0 else LSTM_HIDDEN
        lstm.append({
            "w_ih": jax.random.uniform(k0, (4 * LSTM_HIDDEN, in_sz), jnp.float32, -bound, bound),
            "w_hh": jax.random.uniform(k1, (4 * LSTM_HIDDEN, LSTM_HIDDEN), jnp.float32, -bound, bound),
            "b_ih": jax.random.uniform(k2, (4 * LSTM_HIDDEN,), jnp.float32, -bound, bound),
            "b_hh": jax.random.uniform(k3, (4 * LSTM_HIDDEN,), jnp.float32, -bound, bound),
        })
    params["lstm"] = lstm

    fcb = 1.0 / (LSTM_HIDDEN ** 0.5)
    params["fc_w"] = jax.random.uniform(keys[6], (1, LSTM_HIDDEN), jnp.float32, -fcb, fcb)
    params["linear_1_bias"] = jnp.zeros(num_classes - 1, jnp.float32)
    return params


# ----------------------------------------------------------------------------
# Full forward (matches LSTM_ResNet.forward)
# ----------------------------------------------------------------------------
def lstm_resnet_forward(params, x_nchw, frame_num):
    x = jnp.transpose(x_nchw.astype(jnp.float32), (0, 2, 3, 1))   # NCHW -> NHWC
    x, s, q = conv2d_bn(x, params["conv1_w"], stride=2, pad=3)
    x = batchnorm_act(x, s, q, params["bn1_g"], params["bn1_b"], relu=True)
    x = maxpool3x3_s2(x)
    for name in ("layer1", "layer2", "layer3", "layer4"):
        for blk in params[name]:
            x = bottleneck_forward(x, blk)
    x = avgpool7_s1_p2(x)
    # x.view(-1, frame_num, 2048) in NCHW order
    x = jnp.transpose(x, (0, 3, 1, 2)).reshape(-1, frame_num, LSTM_INPUT)
    h_last = lstm_forward(x, params["lstm"], LSTM_HIDDEN)          # (Bseq, 2048)
    logits = pallas_matmul(h_last, params["fc_w"].T)               # (Bseq, 1), no bias
    logits = logits + params["linear_1_bias"][None, :]             # broadcast -> (Bseq, K-1)
    probas = jax.nn.sigmoid(logits)
    return logits, probas


# ----------------------------------------------------------------------------
# Demo
# ----------------------------------------------------------------------------
if __name__ == "__main__":
    num_classes = 5
    frame_num = 2
    grayscale = False
    layers = [1, 1, 1, 1]          # small Bottleneck ResNet ("layers" arg of the module)

    key = jax.random.PRNGKey(0)
    kp, kx = jax.random.split(key)
    params = init_params(kp, layers, num_classes, grayscale)

    # NCHW input like PyTorch; 96x96 so layer4 output is 3x3 and avgpool(7,1,2) -> 1x1,
    # and the view(-1, frame_num, 2048) groups the batch of 2 images into 1 sequence.
    x = jax.random.normal(kx, (2, 3, 96, 96), jnp.float32)

    logits, probas = lstm_resnet_forward(params, x, frame_num)
    jax.block_until_ready((logits, probas))
    assert logits.shape == (1, num_classes - 1)
    assert probas.shape == (1, num_classes - 1)
    print("KERNEL_OK")
</pallas_src>

<mosaic_0001>
module attributes {stable_mosaic.version = 11 : i64} {
  func.func @_matmul_stats_kernel(%arg0: i32, %arg1: i32, %arg2: i32, %arg3: memref<256x256xbf16, #tpu.memory_space<vmem>>, %arg4: memref<256x128xbf16, #tpu.memory_space<vmem>>, %arg5: memref<256x128xf32, #tpu.memory_space<vmem>>, %arg6: memref<1x128xf32, #tpu.memory_space<vmem>>, %arg7: memref<1x128xf32, #tpu.memory_space<vmem>>, %arg8: memref<256x128xf32, #tpu.memory_space<vmem>>, %arg9: memref<1x128xf32, #tpu.memory_space<vmem>>, %arg10: memref<1x128xf32, #tpu.memory_space<vmem>>) attributes {dimension_semantics = [#tpu.dimension_semantics<parallel>, #tpu.dimension_semantics<arbitrary>, #tpu.dimension_semantics<arbitrary>], iteration_bounds = array<i64: 1, 18, 1>, scalar_prefetch = 0 : i64, scratch_operands = 3 : i64, tpu.core_type = #tpu.core_type<tc>, window_params = [{transform_indices = @transform_0, window_bounds = array<i64: 256, 256>}, {transform_indices = @transform_1, window_bounds = array<i64: 256, 128>}, {transform_indices = @transform_2, window_bounds = array<i64: 256, 128>}, {transform_indices = @transform_3, window_bounds = array<i64: 1, 128>}, {transform_indices = @transform_4, window_bounds = array<i64: 1, 128>}]} {
    %c0_i32 = arith.constant 0 : i32
    %0 = arith.cmpi eq, %arg2, %c0_i32 : i32
    %1 = arith.extui %0 : i1 to i32
    %c0_i32_0 = arith.constant 0 : i32
    %2 = arith.cmpi ne, %1, %c0_i32_0 : i32
    scf.if %2 {
      %cst_15 = arith.constant 0.000000e+00 : f32
      %22 = vector.broadcast %cst_15 : f32 to vector<256x128xf32>
      %c0_16 = arith.constant 0 : index
      %c0_17 = arith.constant 0 : index
      %23 = vector.load %arg8[%c0_16, %c0_17] : memref<256x128xf32, #tpu.memory_space<vmem>>, vector<256x128xf32>
      tpu.vector_store %arg8[%c0_16, %c0_17], %22 {strides = array<i32>} : memref<256x128xf32, #tpu.memory_space<vmem>>, vector<256x128xf32>,
    } else {
    }
    %c0_i32_1 = arith.constant 0 : i32
    %3 = arith.cmpi eq, %arg1, %c0_i32_1 : i32
    %c0_i32_2 = arith.constant 0 : i32
    %4 = arith.cmpi eq, %arg2, %c0_i32_2 : i32
    %5 = arith.andi %3, %4 : i1
    %6 = arith.extui %5 : i1 to i32
    %c0_i32_3 = arith.constant 0 : i32
    %7 = arith.cmpi ne, %6, %c0_i32_3 : i32
    scf.if %7 {
      %cst_15 = arith.constant 0.000000e+00 : f32
      %22 = vector.broadcast %cst_15 : f32 to vector<1x128xf32>
      %c0_16 = arith.constant 0 : index
      %c0_17 = arith.constant 0 : index
      %23 = vector.load %arg9[%c0_16, %c0_17] : memref<1x128xf32, #tpu.memory_space<vmem>>, vector<1x128xf32>
      tpu.vector_store %arg9[%c0_16, %c0_17], %22 {strides = array<i32>} : memref<1x128xf32, #tpu.memory_space<vmem>>, vector<1x128xf32>,
      %cst_18 = arith.constant 0.000000e+00 : f32
      %24 = vector.broadcast %cst_18 : f32 to vector<1x128xf32>
      %c0_19 = arith.constant 0 : index
      %c0_20 = arith.constant 0 : index
      %25 = vector.load %arg10[%c0_19, %c0_20] : memref<1x128xf32, #tpu.memory_space<vmem>>, vector<1x128xf32>
      tpu.vector_store %arg10[%c0_19, %c0_20], %24 {strides = array<i32>} : memref<1x128xf32, #tpu.memory_space<vmem>>, vector<1x128xf32>,
    } else {
    }
    %c0 = arith.constant 0 : index
    %c0_4 = arith.constant 0 : index
    %8 = vector.load %arg8[%c0, %c0_4] : memref<256x128xf32, #tpu.memory_space<vmem>>, vector<256x128xf32>
    %c0_5 = arith.constant 0 : index
    %c0_6 = arith.constant 0 : index
    %9 = vector.load %arg3[%c0_5, %c0_6] : memref<256x256xbf16, #tpu.memory_space<vmem>>, vector<256x256xbf16>
    %c0_7 = arith.constant 0 : index
    %c0_8 = arith.constant 0 : index
    %10 = vector.load %arg4[%c0_7, %c0_8] : memref<256x128xbf16, #tpu.memory_space<vmem>>, vector<256x128xbf16>
    %cst = arith.constant dense<0.000000e+00> : vector<256x128xf32>
    %11 = tpu.matmul %9, %10, %cst {dimension_numbers = #tpu.dot_dimension_numbers<[1], [0], [0], [1], [0, 0, 1, 1], [], []>} : vector<256x256xbf16>, vector<256x128xbf16>, vector<256x128xf32> -> vector<256x128xf32>
    %12 = arith.addf %8, %11 : vector<256x128xf32>
    %c0_9 = arith.constant 0 : index
    %c0_10 = arith.constant 0 : index
    %13 = vector.load %arg8[%c0_9, %c0_10] : memref<256x128xf32, #tpu.memory_space<vmem>>, vector<256x128xf32>
    tpu.vector_store %arg8[%c0_9, %c0_10], %12 {strides = array<i32>} : memref<256x128xf32, #tpu.memory_space<vmem>>, vector<256x128xf32>,
    %c0_i32_11 = arith.constant 0 : i32
    %14 = arith.cmpi eq, %arg2, %c0_i32_11 : i32
    %15 = arith.extui %14 : i1 to i32
    %c0_i32_12 = arith.constant 0 : i32
    %16 = arith.cmpi ne, %15, %c0_i32_12 : i32
    scf.if %16 {
      %c0_15 = arith.constant 0 : index
      %c0_16 = arith.constant 0 : index
      %22 = vector.load %arg8[%c0_15, %c0_16] : memref<256x128xf32, #tpu.memory_space<vmem>>, vector<256x128xf32>
      %c0_17 = arith.constant 0 : index
      %c0_18 = arith.constant 0 : index
      %23 = vector.load %arg5[%c0_17, %c0_18] : memref<256x128xf32, #tpu.memory_space<vmem>>, vector<256x128xf32>
      tpu.vector_store %arg5[%c0_17, %c0_18], %22 {strides = array<i32>} : memref<256x128xf32, #tpu.memory_space<vmem>>, vector<256x128xf32>,
      %c0_19 = arith.constant 0 : index
      %c0_20 = arith.constant 0 : index
      %24 = vector.load %arg9[%c0_19, %c0_20] : memref<1x128xf32, #tpu.memory_space<vmem>>, vector<1x128xf32>
      %cst_21 = arith.constant dense<0.000000e+00> : vector<128xf32>
      %25 = vector.multi_reduction <add>, %22, %cst_21 [0] : vector<256x128xf32> to vector<128xf32>
      %26 = vector.shape_cast %25 : vector<128xf32> to vector<1x128xf32>
      %27 = arith.addf %24, %26 : vector<1x128xf32>
      %c0_22 = arith.constant 0 : index
      %c0_23 = arith.constant 0 : index
      %28 = vector.load %arg9[%c0_22, %c0_23] : memref<1x128xf32, #tpu.memory_space<vmem>>, vector<1x128xf32>
      tpu.vector_store %arg9[%c0_22, %c0_23], %27 {strides = array<i32>} : memref<1x128xf32, #tpu.memory_space<vmem>>, vector<1x128xf32>,
      %c0_24 = arith.constant 0 : index
      %c0_25 = arith.constant 0 : index
      %29 = vector.load %arg10[%c0_24, %c0_25] : memref<1x128xf32, #tpu.memory_space<vmem>>, vector<1x128xf32>
      %30 = arith.mulf %22, %22 : vector<256x128xf32>
      %cst_26 = arith.constant dense<0.000000e+00> : vector<128xf32>
      %31 = vector.multi_reduction <add>, %30, %cst_26 [0] : vector<256x128xf32> to vector<128xf32>
      %32 = vector.shape_cast %31 : vector<128xf32> to vector<1x128xf32>
      %33 = arith.addf %29, %32 : vector<1x128xf32>
      %c0_27 = arith.constant 0 : index
      %c0_28 = arith.constant 0 : index
      %34 = vector.load %arg10[%c0_27, %c0_28] : memref<1x128xf32, #tpu.memory_space<vmem>>, vector<1x128xf32>
      tpu.vector_store %arg10[%c0_27, %c0_28], %33 {strides = array<i32>} : memref<1x128xf32, #tpu.memory_space<vmem>>, vector<1x128xf32>,
    } else {
    }
    %c17_i32 = arith.constant 17 : i32
    %17 = arith.cmpi eq, %arg1, %c17_i32 : i32
    %c0_i32_13 = arith.constant 0 : i32
    %18 = arith.cmpi eq, %arg2, %c0_i32_13 : i32
    %19 = arith.andi %17, %18 : i1
    %20 = arith.extui %19 : i1 to i32
    %c0_i32_14 = arith.constant 0 : i32
    %21 = arith.cmpi ne, %20, %c0_i32_14 : i32
    scf.if %21 {
      %c0_15 = arith.constant 0 : index
      %c0_16 = arith.constant 0 : index
      %22 = vector.load %arg9[%c0_15, %c0_16] : memref<1x128xf32, #tpu.memory_space<vmem>>, vector<1x128xf32>
      %c0_17 = arith.constant 0 : index
      %c0_18 = arith.constant 0 : index
      %23 = vector.load %arg6[%c0_17, %c0_18] : memref<1x128xf32, #tpu.memory_space<vmem>>, vector<1x128xf32>
      tpu.vector_store %arg6[%c0_17, %c0_18], %22 {strides = array<i32>} : memref<1x128xf32, #tpu.memory_space<vmem>>, vector<1x128xf32>,
      %c0_19 = arith.constant 0 : index
      %c0_20 = arith.constant 0 : index
      %24 = vector.load %arg10[%c0_19, %c0_20] : memref<1x128xf32, #tpu.memory_space<vmem>>, vector<1x128xf32>
      %c0_21 = arith.constant 0 : index
      %c0_22 = arith.constant 0 : index
      %25 = vector.load %arg7[%c0_21, %c0_22] : memref<1x128xf32, #tpu.memory_space<vmem>>, vector<1x128xf32>
      tpu.vector_store %arg7[%c0_21, %c0_22], %24 {strides = array<i32>} : memref<1x128xf32, #tpu.memory_space<vmem>>, vector<1x128xf32>,
    } else {
    }
    return
  }
  func.func @transform_0(%arg0: i32, %arg1: i32, %arg2: i32) -> (i32, i32) {
    %c0_i32 = arith.constant 0 : i32
    return %arg1, %arg2 : i32, i32
  }
  func.func @transform_1(%arg0: i32, %arg1: i32, %arg2: i32) -> (i32, i32) {
    %c0_i32 = arith.constant 0 : i32
    return %arg2, %arg0 : i32, i32
  }
  func.func @transform_2(%arg0: i32, %arg1: i32, %arg2: i32) -> (i32, i32) {
    %c0_i32 = arith.constant 0 : i32
    return %arg1, %arg0 : i32, i32
  }
  func.func @transform_3(%arg0: i32, %arg1: i32, %arg2: i32) -> (i32, i32) {
    %c0_i32 = arith.constant 0 : i32
    %c0_i32_0 = arith.constant 0 : i32
    return %c0_i32, %arg0 : i32, i32
  }
  func.func @transform_4(%arg0: i32, %arg1: i32, %arg2: i32) -> (i32, i32) {
    %c0_i32 = arith.constant 0 : i32
    %c0_i32_0 = arith.constant 0 : i32
    return %c0_i32, %arg0 : i32, i32
  }
}

</mosaic_0001>

<llo_original>
// kernel: tpu_custom_call.1
$region0: #{tpu_custom_call.1}
  #allocation0 [shape = 'u32[]', space=smem, size = 0x4, offset = 0x4, fixed_abs, tag = 'smem constant byte address 0x4 - core index']
  #allocation1 [shape = 'u32[144,128]{1,0:T(1,128)}', space=vmem, size = 0x12000, scoped, tag = 'internal scratch']
  #allocation2 [shape = 'f32[256,128]{1,0:T(8,128)}', space=vmem, size = 0x20000, scoped, tag = 'scratch operand']
  #allocation3 [shape = 'f32[1,128]{1,0:T(1,128)}', space=vmem, size = 0x200, scoped, tag = 'scratch operand']
  #allocation4 [shape = 'f32[1,128]{1,0:T(1,128)}', space=vmem, size = 0x200, scoped, tag = 'scratch operand']
  %s0 = inlined_call_operand.hbm [shape: bf16[4608,256], index: 0, kind: input, shape index: {}]
  %s1 = inlined_call_operand.hbm [shape: bf16[256,128], index: 1, kind: input, shape index: {}]
  %s2 = inlined_call_operand.hbm [shape: f32[4608,128], index: 2, kind: output, shape index: {0}]
  %s3 = inlined_call_operand.hbm [shape: f32[1,128], index: 3, kind: output, shape index: {1}]
  %s4 = inlined_call_operand.hbm [shape: f32[1,128], index: 4, kind: output, shape index: {2}]
  %5 = xla_tuple %s2, %s3, %s4
  %s6 = sld [smem:[#allocation0]]
  $region81: #{tpu_custom_call.1} parent=0
    _
  %s8 = ssub.s32 1, %s6
  %s9 = scalar_select 0, %s8, %s6
  $region1: #{tpu_custom_call.1} parent=0
    #allocation5 [shape = 'u8[262144]{0}', space=vmem, size = 0x40000, scoped, tag = 'input window, operand 0']
    #allocation6 [shape = 's32[2]{0}', space=sflag, size = 0x8, scoped, tag = 'scoped memory for tpu_custom_call.1']
    #allocation7 [shape = 's32[2]{0}', space=sflag, size = 0x8, scoped, tag = 'scoped memory for tpu_custom_call.1']
    #allocation8 [shape = 'u8[65536]{0}', space=vmem, size = 0x10000, scoped, tag = 'input window, operand 1, single buffered']
    #allocation9 [shape = 's32[1]{0}', space=sflag, size = 0x4, scoped, tag = 'scoped memory for tpu_custom_call.1']
    #allocation10 [shape = 'u8[262144]{0}', space=vmem, size = 0x40000, scoped, tag = 'output window, operand 0']
    #allocation11 [shape = 'u8[512]{0}', space=vmem, size = 0x400, scoped, tag = 'output window, operand 1, single buffered']
    #allocation12 [shape = 's32[1]{0}', space=sflag, size = 0x4, scoped, tag = 'scoped memory for tpu_custom_call.1']
    #allocation13 [shape = 'u8[512]{0}', space=vmem, size = 0x400, scoped, tag = 'output window, operand 2, single buffered']
    %10 = vsyncpa [#allocation6], 0
    %s11 = scalar_lea.sflag [#allocation6], 1
    %12 = vsyncpa %s11, 0
    %13 = vsyncpa [#allocation9], 0
    %14 = vsyncpa [#allocation7], 0
    %s15 = scalar_lea.sflag [#allocation7], 1
    %16 = vsyncpa %s15, 0
    %17 = vsyncpa [#allocation12], 0
    loop: start=0, step=1, limit=20
    $region2: #{tpu_custom_call.1} parent=1 // loop_pre_header
      _
    $region3: #{tpu_custom_call.1} parent=1 // loop_header
      %s19 = sphi 0, %s23
      %p20 = scmp.ge.s32.totalorder %s19, 20
      %s26 = sphi 0, %s45
      %s27 = sphi 0, %s41
      %s28 = sphi 0, %s37
      %s29 = sphi 0, %s26
      %s30 = sphi 0, %s27
      %s31 = sphi 0, %s28
      %s32 = sphi 0, %s29
      %s33 = sphi 0, %s30
      %s34 = sphi 0, %s31
      %s50 = sphi 0, %s52
      %s53 = sphi 0, %s50
      %s54 = sphi 0, %s53
      %s70 = sphi 0, %s54
      %s78 = sphi 0, %s80
      %s81 = sphi 0, %s78
      %s82 = sphi 0, %s81
      %s98 = sphi 0, %s82
      %s106 = sphi 0, %s108
      %s109 = sphi 0, %s106
      %s110 = sphi 0, %s109
      %s126 = sphi 0, %s110
      %s132 = sphi 0, %s134
      %s135 = sphi 0, %s132
      %s136 = sphi 0, %s135
      %s152 = sphi 0, %s136
      %s158 = sphi 0, %s160
      %s161 = sphi 0, %s158
      %s162 = sphi 0, %s161
      %s178 = sphi 0, %s162
    $region4: #{tpu_custom_call.1} parent=1 // loop_header_branch
      %22 = sbr.rel (%p20) target = $region8
    $region5: #{tpu_custom_call.1} parent=1 // loop_body
      %s24 = ssub.s32 %s19, 1
      %s25 = ssub.s32 %s19, 2
      %s35 = sadd.s32 1, %s28
      %p36 = scmp.ge.s32.totalorder %s35, 1
      %s37 = scalar_select %p36, 0, %s35
      %s38 = sadd.s32 1, %s27
      %s39 = scalar_select %p36, %s38, %s27
      %p40 = scmp.ge.s32.totalorder %s39, 18
      %s41 = scalar_select %p40, 0, %s39
      %s42 = sadd.s32 1, %s26
      %s43 = scalar_select %p40, %s42, %s26
      %p44 = scmp.ge.s32.totalorder %s43, 1
      %s45 = scalar_select %p44, 0, %s43
      %s46 = ssub.s32 %s27, %s41
      %s47 = ssub.s32 %s28, %s37
      %s48 = sor.u32 %s46, %s47
      %p49 = scmp.eq.s32.totalorder %s48, 0
      %s51 = sadd.s32 %s50, 1
      %s52 = scalar_select %p49, %s50, %s51
      %p55 = pneg %p49
      %p56 = scmp.eq.s32.totalorder %s19, 17
      %p57 = por %p55, %p56
      %p58 = scmp.ne.s32.totalorder %s50, %s53
      %p59 = scmp.eq.s32.totalorder %s19, 0
      %p60 = por %p58, %p59
      %p61 = scmp.ne.s32.totalorder %s50, %s53
      %p62 = scmp.eq.s32.totalorder %s24, 17
      %p63 = por %p61, %p62
      %p64 = scmp.ne.s32.totalorder %s53, %s54
      %p65 = scmp.eq.s32.totalorder %s24, 0
      %p66 = por %p64, %p65
      %p67 = scmp.ne.s32.totalorder %s53, %s54
      %p68 = scmp.eq.s32.totalorder %s25, 17
      %p69 = por %p67, %p68
      %p71 = scmp.ne.s32.totalorder %s54, %s70
      %p72 = scmp.eq.s32.totalorder %s25, 0
      %p73 = por %p71, %p72
      %s74 = ssub.s32 %s28, %s37
      %s75 = ssub.s32 %s26, %s45
      %s76 = sor.u32 %s74, %s75
      %p77 = scmp.eq.s32.totalorder %s76, 0
      %s79 = sadd.s32 %s78, 1
      %s80 = scalar_select %p77, %s78, %s79
      %p83 = pneg %p77
      %p84 = scmp.eq.s32.totalorder %s19, 17
      %p85 = por %p83, %p84
      %p86 = scmp.ne.s32.totalorder %s78, %s81
      %p87 = scmp.eq.s32.totalorder %s19, 0
      %p88 = por %p86, %p87
      %p89 = scmp.ne.s32.totalorder %s78, %s81
      %p90 = scmp.eq.s32.totalorder %s24, 17
      %p91 = por %p89, %p90
      %p92 = scmp.ne.s32.totalorder %s81, %s82
      %p93 = scmp.eq.s32.totalorder %s24, 0
      %p94 = por %p92, %p93
      %p95 = scmp.ne.s32.totalorder %s81, %s82
      %p96 = scmp.eq.s32.totalorder %s25, 17
      %p97 = por %p95, %p96
      %p99 = scmp.ne.s32.totalorder %s82, %s98
      %p100 = scmp.eq.s32.totalorder %s25, 0
      %p101 = por %p99, %p100
      %s102 = ssub.s32 %s27, %s41
      %s103 = ssub.s32 %s26, %s45
      %s104 = sor.u32 %s102, %s103
      %p105 = scmp.eq.s32.totalorder %s104, 0
      %s107 = sadd.s32 %s106, 1
      %s108 = scalar_select %p105, %s106, %s107
      %p111 = pneg %p105
      %p112 = scmp.eq.s32.totalorder %s19, 17
      %p113 = por %p111, %p112
      %p114 = scmp.ne.s32.totalorder %s106, %s109
      %p115 = scmp.eq.s32.totalorder %s19, 0
      %p116 = por %p114, %p115
      %p117 = scmp.ne.s32.totalorder %s106, %s109
      %p118 = scmp.eq.s32.totalorder %s24, 17
      %p119 = por %p117, %p118
      %p120 = scmp.ne.s32.totalorder %s109, %s110
      %p121 = scmp.eq.s32.totalorder %s24, 0
      %p122 = por %p120, %p121
      %p123 = scmp.ne.s32.totalorder %s109, %s110
      %p124 = scmp.eq.s32.totalorder %s25, 17
      %p125 = por %p123, %p124
      %p127 = scmp.ne.s32.totalorder %s110, %s126
      %p128 = scmp.eq.s32.totalorder %s25, 0
      %p129 = por %p127, %p128
      %s130 = ssub.s32 %s26, %s45
      %p131 = scmp.eq.s32.totalorder %s130, 0
      %s133 = sadd.s32 %s132, 1
      %s134 = scalar_select %p131, %s132, %s133
      %p137 = pneg %p131
      %p138 = scmp.eq.s32.totalorder %s19, 17
      %p139 = por %p137, %p138
      %p140 = scmp.ne.s32.totalorder %s132, %s135
      %p141 = scmp.eq.s32.totalorder %s19, 0
      %p142 = por %p140, %p141
      %p143 = scmp.ne.s32.totalorder %s132, %s135
      %p144 = scmp.eq.s32.totalorder %s24, 17
      %p145 = por %p143, %p144
      %p146 = scmp.ne.s32.totalorder %s135, %s136
      %p147 = scmp.eq.s32.totalorder %s24, 0
      %p148 = por %p146, %p147
      %p149 = scmp.ne.s32.totalorder %s135, %s136
      %p150 = scmp.eq.s32.totalorder %s25, 17
      %p151 = por %p149, %p150
      %p153 = scmp.ne.s32.totalorder %s136, %s152
      %p154 = scmp.eq.s32.totalorder %s25, 0
      %p155 = por %p153, %p154
      %s156 = ssub.s32 %s26, %s45
      %p157 = scmp.eq.s32.totalorder %s156, 0
      %s159 = sadd.s32 %s158, 1
      %s160 = scalar_select %p157, %s158, %s159
      %p163 = pneg %p157
      %p164 = scmp.eq.s32.totalorder %s19, 17
      %p165 = por %p163, %p164
      %p166 = scmp.ne.s32.totalorder %s158, %s161
      %p167 = scmp.eq.s32.totalorder %s19, 0
      %p168 = por %p166, %p167
      %p169 = scmp.ne.s32.totalorder %s158, %s161
      %p170 = scmp.eq.s32.totalorder %s24, 17
      %p171 = por %p169, %p170
      %p172 = scmp.ne.s32.totalorder %s161, %s162
      %p173 = scmp.eq.s32.totalorder %s24, 0
      %p174 = por %p172, %p173
      %p175 = scmp.ne.s32.totalorder %s161, %s162
      %p176 = scmp.eq.s32.totalorder %s25, 17
      %p177 = por %p175, %p176
      %p179 = scmp.ne.s32.totalorder %s162, %s178
      %p180 = scmp.eq.s32.totalorder %s25, 0
      %p181 = por %p179, %p180
      %p182 = scmp.le.s32.totalorder 1, %s19
      %p183 = scmp.lt.s32.totalorder %s19, 19
      %p184 = pnand %p182, %p183
      %p185 = pneg %p184
      // Predicated region
      $region9: #{tpu_custom_call.1} parent=5 // pred_check
        _
      $region10: #{tpu_custom_call.1} parent=5 // pred_check_branch
        %187 = sbr.rel (%p184) target = $region12
      $region11: #{tpu_custom_call.1} parent=5 // pred_region
        %s188 = ssub.s32 %s19, 1
        // Predicated region
        $region13: #{tpu_custom_call.1} parent=11 // pred_check
          %p189 = pneg %p94
        $region14: #{tpu_custom_call.1} parent=11 // pred_check_branch
          %191 = sbr.rel (%p189) target = $region16
        $region15: #{tpu_custom_call.1} parent=11 // pred_region
          %s192 = smul.u32 32, %s31
          %s194 = ssub.s32 2048, 2048
          %195 = vsyncadd [#allocation9], %s194
          %s196 = sadd.s32 %s29, %s192
          %s197 = smul.addr %s196, 64
          %s198 = scalar_lea.hbm %s1, %s197
          %s199 = sshll.u32 [#allocation8], 4
          %s200 = int_to_ptr.vmem [resolvable:$true] %s199
          %205 = dma.hbm_to_vmem [thread:$0]  %s198, 2048, %s200, [#allocation9], 64, 64, 4
        $region16: #{tpu_custom_call.1} parent=11 // pred_fallthru
          _
      $region12: #{tpu_custom_call.1} parent=5 // pred_fallthru
        _
      %p206 = scmp.lt.s32.totalorder %s19, 18
      // Predicated region
      $region17: #{tpu_custom_call.1} parent=5 // pred_check
        %p207 = pneg %p206
      $region18: #{tpu_custom_call.1} parent=5 // pred_check_branch
        %209 = sbr.rel (%p207) target = $region20
      $region19: #{tpu_custom_call.1} parent=5 // pred_region
        // Predicated region
        $region21: #{tpu_custom_call.1} parent=19 // pred_check
          %p210 = pneg %p60
        $region22: #{tpu_custom_call.1} parent=19 // pred_check_branch
          %212 = sbr.rel (%p210) target = $region24
        $region23: #{tpu_custom_call.1} parent=19 // pred_region
          %s213 = sand.u32 %s50, 1
          %s214 = scalar_lea.sflag [#allocation6], %s213
          %s215 = sand.u32 %s50, 1
          %s216 = smul.addr %s215, 256
          %s217 = scalar_lea.vmem [#allocation5], %s216
          %s218 = smul.u32 32, %s27
          %s219 = smul.u32 2, %s28
          %s221 = ssub.s32 4096, 4096
          %222 = vsyncadd %s214, %s221
          %s223 = smul.addr %s218, 2
          %s224 = sadd.s32 %s219, %s223
          %s225 = smul.addr %s224, 64
          %s226 = scalar_lea.hbm %s0, %s225
          %s227 = sshll.u32 %s217, 4
          %s228 = int_to_ptr.vmem [resolvable:$true] %s227
          %233 = dma.hbm_to_vmem [thread:$0]  %s226, 4096, %s228, %s214, 128, 128, 8
        $region24: #{tpu_custom_call.1} parent=19 // pred_fallthru
          _
      $region20: #{tpu_custom_call.1} parent=5 // pred_fallthru
        _
      %p234 = scmp.le.s32.totalorder 1, %s19
      %p235 = scmp.lt.s32.totalorder %s19, 19
      %p236 = pnand %p234, %p235
      %p237 = pneg %p236
      // Predicated region
      $region25: #{tpu_custom_call.1} parent=5 // pred_check
        _
      $region26: #{tpu_custom_call.1} parent=5 // pred_check_branch
        %239 = sbr.rel (%p236) target = $region28
      $region27: #{tpu_custom_call.1} parent=5 // pred_region
        %s240 = ssub.s32 %s19, 1
        %s241 = sand.u32 %s53, 1
        %s242 = scalar_lea.sflag [#allocation6], %s241
        %s243 = sand.u32 %s53, 1
        %s244 = smul.addr %s243, 256
        %s245 = scalar_lea.vmem [#allocation5], %s244
        // Predicated region
        $region29: #{tpu_custom_call.1} parent=27 // pred_check
          %p246 = pneg %p66
        $region30: #{tpu_custom_call.1} parent=27 // pred_check_branch
          %248 = sbr.rel (%p246) target = $region32
        $region31: #{tpu_custom_call.1} parent=27 // pred_region
          %249 = dma.done %s242, 4096
        $region32: #{tpu_custom_call.1} parent=27 // pred_fallthru
          _
        // Predicated region
        $region33: #{tpu_custom_call.1} parent=27 // pred_check
          %p250 = pneg %p94
        $region34: #{tpu_custom_call.1} parent=27 // pred_check_branch
          %252 = sbr.rel (%p250) target = $region36
        $region35: #{tpu_custom_call.1} parent=27 // pred_region
          %253 = dma.done [#allocation9], 2048
        $region36: #{tpu_custom_call.1} parent=27 // pred_fallthru
          _
        %s254 = sand.u32 %s53, 1
        %s255 = scalar_lea.sflag [#allocation6], %s254
        %s256 = sand.u32 %s53, 1
        %s257 = smul.addr %s256, 256
        %s258 = scalar_lea.vmem [#allocation5], %s257
        %p259 = pneg %p66
        %p260 = pneg %p63
        %p261 = pneg %p94
        %p262 = pneg %p91
        %p263 = pneg %p122
        %p264 = pneg %p119
        %s265 = sand.u32 %s109, 1
        %s266 = scalar_lea.sflag [#allocation7], %s265
        %s267 = sand.u32 %s109, 1
        %s268 = smul.addr %s267, 256
        %s269 = scalar_lea.vmem [#allocation10], %s268
        %p270 = pneg %p148
        %p271 = pneg %p145
        %p272 = pneg %p174
        %p273 = pneg %p171
        %s274 = smul.u32 32, %s30
        %s275 = smul.u32 2, %s31
        %s276 = smul.u32 32, %s31
        %s277 = smul.u32 32, %s30
        %p279 = scmp.eq.s32.totalorder %s31, 0
        // Predicated region
        $region37: #{tpu_custom_call.1} parent=27 // pred_check
          %p280 = pneg %p279
        $region38: #{tpu_custom_call.1} parent=27 // pred_check_branch
          %282 = sbr.rel (%p280) target = $region40
        $region39: #{tpu_custom_call.1} parent=27 // pred_region
          %283 = vst [vmem:[#allocation2] sm:$0xff] 0.0
          %284 = vst [vmem:[#allocation2 + $0x8] sm:$0xff] 0.0
          %285 = vst [vmem:[#allocation2 + $0x10] sm:$0xff] 0.0
          %286 = vst [vmem:[#allocation2 + $0x18] sm:$0xff] 0.0
          %287 = vst [vmem:[#allocation2 + $0x20] sm:$0xff] 0.0
          %288 = vst [vmem:[#allocation2 + $0x28] sm:$0xff] 0.0
          %289 = vst [vmem:[#allocation2 + $0x30] sm:$0xff] 0.0
          %290 = vst [vmem:[#allocation2 + $0x38] sm:$0xff] 0.0
          %291 = vst [vmem:[#allocation2 + $0x40] sm:$0xff] 0.0
          %292 = vst [vmem:[#allocation2 + $0x48] sm:$0xff] 0.0
          %293 = vst [vmem:[#allocation2 + $0x50] sm:$0xff] 0.0
          %294 = vst [vmem:[#allocation2 + $0x58] sm:$0xff] 0.0
          %295 = vst [vmem:[#allocation2 + $0x60] sm:$0xff] 0.0
          %296 = vst [vmem:[#allocation2 + $0x68] sm:$0xff] 0.0
          %297 = vst [vmem:[#allocation2 + $0x70] sm:$0xff] 0.0
          %298 = vst [vmem:[#allocation2 + $0x78] sm:$0xff] 0.0
          %299 = vst [vmem:[#allocation2 + $0x80] sm:$0xff] 0.0
          %300 = vst [vmem:[#allocation2 + $0x88] sm:$0xff] 0.0
          %301 = vst [vmem:[#allocation2 + $0x90] sm:$0xff] 0.0
          %302 = vst [vmem:[#allocation2 + $0x98] sm:$0xff] 0.0
          %303 = vst [vmem:[#allocation2 + $0xa0] sm:$0xff] 0.0
          %304 = vst [vmem:[#allocation2 + $0xa8] sm:$0xff] 0.0
          %305 = vst [vmem:[#allocation2 + $0xb0] sm:$0xff] 0.0
          %306 = vst [vmem:[#allocation2 + $0xb8] sm:$0xff] 0.0
          %307 = vst [vmem:[#allocation2 + $0xc0] sm:$0xff] 0.0
          %308 = vst [vmem:[#allocation2 + $0xc8] sm:$0xff] 0.0
          %309 = vst [vmem:[#allocation2 + $0xd0] sm:$0xff] 0.0
          %310 = vst [vmem:[#allocation2 + $0xd8] sm:$0xff] 0.0
          %311 = vst [vmem:[#allocation2 + $0xe0] sm:$0xff] 0.0
          %312 = vst [vmem:[#allocation2 + $0xe8] sm:$0xff] 0.0
          %313 = vst [vmem:[#allocation2 + $0xf0] sm:$0xff] 0.0
          %314 = vst [vmem:[#allocation2 + $0xf8] sm:$0xff] 0.0
        $region40: #{tpu_custom_call.1} parent=27 // pred_fallthru
          _
        %p315 = scmp.eq.s32.totalorder %s30, 0
        %p316 = pnand %p315, %p279
        %p317 = pneg %p316
        // Predicated region
        $region41: #{tpu_custom_call.1} parent=27 // pred_check
          _
        $region42: #{tpu_custom_call.1} parent=27 // pred_check_branch
          %319 = sbr.rel (%p316) target = $region44
        $region43: #{tpu_custom_call.1} parent=27 // pred_region
          %320 = vst [vmem:[#allocation3] sm:$0x1] 0.0
          %321 = vst [vmem:[#allocation4] sm:$0x1] 0.0
        $region44: #{tpu_custom_call.1} parent=27 // pred_fallthru
          _
        %v322 = vld [vmem:[#allocation2] sm:$0xff]
        %v323 = vld [vmem:[#allocation2 + $0x8] sm:$0xff]
        %v324 = vld [vmem:[#allocation2 + $0x10] sm:$0xff]
        %v325 = vld [vmem:[#allocation2 + $0x18] sm:$0xff]
        %v326 = vld [vmem:[#allocation2 + $0x20] sm:$0xff]
        %v327 = vld [vmem:[#allocation2 + $0x28] sm:$0xff]
        %v328 = vld [vmem:[#allocation2 + $0x30] sm:$0xff]
        %v329 = vld [vmem:[#allocation2 + $0x38] sm:$0xff]
        %v330 = vld [vmem:[#allocation2 + $0x40] sm:$0xff]
        %v331 = vld [vmem:[#allocation2 + $0x48] sm:$0xff]
        %v332 = vld [vmem:[#allocation2 + $0x50] sm:$0xff]
        %v333 = vld [vmem:[#allocation2 + $0x58] sm:$0xff]
        %v334 = vld [vmem:[#allocation2 + $0x60] sm:$0xff]
        %v335 = vld [vmem:[#allocation2 + $0x68] sm:$0xff]
        %v336 = vld [vmem:[#allocation2 + $0x70] sm:$0xff]
        %v337 = vld [vmem:[#allocation2 + $0x78] sm:$0xff]
        %v338 = vld [vmem:[#allocation2 + $0x80] sm:$0xff]
        %v339 = vld [vmem:[#allocation2 + $0x88] sm:$0xff]
        %v340 = vld [vmem:[#allocation2 + $0x90] sm:$0xff]
        %v341 = vld [vmem:[#allocation2 + $0x98] sm:$0xff]
        %v342 = vld [vmem:[#allocation2 + $0xa0] sm:$0xff]
        %v343 = vld [vmem:[#allocation2 + $0xa8] sm:$0xff]
        %v344 = vld [vmem:[#allocation2 + $0xb0] sm:$0xff]
        %v345 = vld [vmem:[#allocation2 + $0xb8] sm:$0xff]
        %v346 = vld [vmem:[#allocation2 + $0xc0] sm:$0xff]
        %v347 = vld [vmem:[#allocation2 + $0xc8] sm:$0xff]
        %v348 = vld [vmem:[#allocation2 + $0xd0] sm:$0xff]
        %v349 = vld [vmem:[#allocation2 + $0xd8] sm:$0xff]
        %v350 = vld [vmem:[#allocation2 + $0xe0] sm:$0xff]
        %v351 = vld [vmem:[#allocation2 + $0xe8] sm:$0xff]
        %v352 = vld [vmem:[#allocation2 + $0xf0] sm:$0xff]
        %v353 = vld [vmem:[#allocation2 + $0xf8] sm:$0xff]
        %v354 = vld [vmem:[%s245] sm:$0xff]
        %v355 = vld [vmem:[%s245 + $0x8] sm:$0xff]
        %v356 = vld [vmem:[%s245 + $0x10] sm:$0xff]
        %v357 = vld [vmem:[%s245 + $0x18] sm:$0xff]
        %v358 = vld [vmem:[%s245 + $0x20] sm:$0xff]
        %v359 = vld [vmem:[%s245 + $0x28] sm:$0xff]
        %v360 = vld [vmem:[%s245 + $0x30] sm:$0xff]
        %v361 = vld [vmem:[%s245 + $0x38] sm:$0xff]
        %v362 = vld [vmem:[%s245 + $0x40] sm:$0xff]
        %v363 = vld [vmem:[%s245 + $0x48] sm:$0xff]
        %v364 = vld [vmem:[%s245 + $0x50] sm:$0xff]
        %v365 = vld [vmem:[%s245 + $0x58] sm:$0xff]
        %v366 = vld [vmem:[%s245 + $0x60] sm:$0xff]
        %v367 = vld [vmem:[%s245 + $0x68] sm:$0xff]
        %v368 = vld [vmem:[%s245 + $0x70] sm:$0xff]
        %v369 = vld [vmem:[%s245 + $0x78] sm:$0xff]
        %v370 = vld [vmem:[%s245 + $0x80] sm:$0xff]
        %v371 = vld [vmem:[%s245 + $0x88] sm:$0xff]
        %v372 = vld [vmem:[%s245 + $0x90] sm:$0xff]
        %v373 = vld [vmem:[%s245 + $0x98] sm:$0xff]
        %v374 = vld [vmem:[%s245 + $0xa0] sm:$0xff]
        %v375 = vld [vmem:[%s245 + $0xa8] sm:$0xff]
        %v376 = vld [vmem:[%s245 + $0xb0] sm:$0xff]
        %v377 = vld [vmem:[%s245 + $0xb8] sm:$0xff]
        %v378 = vld [vmem:[%s245 + $0xc0] sm:$0xff]
        %v379 = vld [vmem:[%s245 + $0xc8] sm:$0xff]
        %v380 = vld [vmem:[%s245 + $0xd0] sm:$0xff]
        %v381 = vld [vmem:[%s245 + $0xd8] sm:$0xff]
        %v382 = vld [vmem:[%s245 + $0xe0] sm:$0xff]
        %v383 = vld [vmem:[%s245 + $0xe8] sm:$0xff]
        %v384 = vld [vmem:[%s245 + $0xf0] sm:$0xff]
        %v385 = vld [vmem:[%s245 + $0xf8] sm:$0xff]
        %v386 = vld [vmem:[#allocation8] sm:$0xf]
        %v387 = vld [vmem:[#allocation8 + $0x4] sm:$0xf]
        %v388 = vld [vmem:[#allocation8 + $0x8] sm:$0xf]
        %v389 = vld [vmem:[#allocation8 + $0xc] sm:$0xf]
        %v390 = vld [vmem:[#allocation8 + $0x10] sm:$0xf]
        %v391 = vld [vmem:[#allocation8 + $0x14] sm:$0xf]
        %v392 = vld [vmem:[#allocation8 + $0x18] sm:$0xf]
        %v393 = vld [vmem:[#allocation8 + $0x1c] sm:$0xf]
        %v394 = vld [vmem:[#allocation8 + $0x20] sm:$0xf]
        %v395 = vld [vmem:[#allocation8 + $0x24] sm:$0xf]
        %v396 = vld [vmem:[#allocation8 + $0x28] sm:$0xf]
        %v397 = vld [vmem:[#allocation8 + $0x2c] sm:$0xf]
        %v398 = vld [vmem:[#allocation8 + $0x30] sm:$0xf]
        %v399 = vld [vmem:[#allocation8 + $0x34] sm:$0xf]
        %v400 = vld [vmem:[#allocation8 + $0x38] sm:$0xf]
        %v401 = vld [vmem:[#allocation8 + $0x3c] sm:$0xf]
        %v402 = vld [vmem:[#allocation8 + $0x40] sm:$0xf]
        %v403 = vld [vmem:[#allocation8 + $0x44] sm:$0xf]
        %v404 = vld [vmem:[#allocation8 + $0x48] sm:$0xf]
        %v405 = vld [vmem:[#allocation8 + $0x4c] sm:$0xf]
        %v406 = vld [vmem:[#allocation8 + $0x50] sm:$0xf]
        %v407 = vld [vmem:[#allocation8 + $0x54] sm:$0xf]
        %v408 = vld [vmem:[#allocation8 + $0x58] sm:$0xf]
        %v409 = vld [vmem:[#allocation8 + $0x5c] sm:$0xf]
        %v410 = vld [vmem:[#allocation8 + $0x60] sm:$0xf]
        %v411 = vld [vmem:[#allocation8 + $0x64] sm:$0xf]
        %v412 = vld [vmem:[#allocation8 + $0x68] sm:$0xf]
        %v413 = vld [vmem:[#allocation8 + $0x6c] sm:$0xf]
        %v414 = vld [vmem:[#allocation8 + $0x70] sm:$0xf]
        %v415 = vld [vmem:[#allocation8 + $0x74] sm:$0xf]
        %v416 = vld [vmem:[#allocation8 + $0x78] sm:$0xf]
        %v417 = vld [vmem:[#allocation8 + $0x7c] sm:$0xf]
        %v450 = vunpack.c.l.b16 %v354
        %v451 = vunpack.c.h.b16 %v354
        %v452 = vunpack.c.l.b16 %v355
        %v453 = vunpack.c.h.b16 %v355
        %v454 = vunpack.c.l.b16 %v356
        %v455 = vunpack.c.h.b16 %v356
        %v456 = vunpack.c.l.b16 %v357
        %v457 = vunpack.c.h.b16 %v357
        %v458 = vunpack.c.l.b16 %v358
        %v459 = vunpack.c.h.b16 %v358
        %v460 = vunpack.c.l.b16 %v359
        %v461 = vunpack.c.h.b16 %v359
        %v462 = vunpack.c.l.b16 %v360
        %v463 = vunpack.c.h.b16 %v360
        %v464 = vunpack.c.l.b16 %v361
        %v465 = vunpack.c.h.b16 %v361
        %v466 = vunpack.c.l.b16 %v362
        %v467 = vunpack.c.h.b16 %v362
        %v468 = vunpack.c.l.b16 %v363
        %v469 = vunpack.c.h.b16 %v363
        %v470 = vunpack.c.l.b16 %v364
        %v471 = vunpack.c.h.b16 %v364
        %v472 = vunpack.c.l.b16 %v365
        %v473 = vunpack.c.h.b16 %v365
        %v474 = vunpack.c.l.b16 %v366
        %v475 = vunpack.c.h.b16 %v366
        %v476 = vunpack.c.l.b16 %v367
        %v477 = vunpack.c.h.b16 %v367
        %v478 = vunpack.c.l.b16 %v368
        %v479 = vunpack.c.h.b16 %v368
        %v480 = vunpack.c.l.b16 %v369
        %v481 = vunpack.c.h.b16 %v369
        %v482 = vunpack.c.l.b16 %v370
        %v483 = vunpack.c.h.b16 %v370
        %v484 = vunpack.c.l.b16 %v371
        %v485 = vunpack.c.h.b16 %v371
        %v486 = vunpack.c.l.b16 %v372
        %v487 = vunpack.c.h.b16 %v372
        %v488 = vunpack.c.l.b16 %v373
        %v489 = vunpack.c.h.b16 %v373
        %v490 = vunpack.c.l.b16 %v374
        %v491 = vunpack.c.h.b16 %v374
        %v492 = vunpack.c.l.b16 %v375
        %v493 = vunpack.c.h.b16 %v375
        %v494 = vunpack.c.l.b16 %v376
        %v495 = vunpack.c.h.b16 %v376
        %v496 = vunpack.c.l.b16 %v377
        %v497 = vunpack.c.h.b16 %v377
        %v498 = vunpack.c.l.b16 %v378
        %v499 = vunpack.c.h.b16 %v378
        %v500 = vunpack.c.l.b16 %v379
        %v501 = vunpack.c.h.b16 %v379
        %v502 = vunpack.c.l.b16 %v380
        %v503 = vunpack.c.h.b16 %v380
        %v504 = vunpack.c.l.b16 %v381
        %v505 = vunpack.c.h.b16 %v381
        %v506 = vunpack.c.l.b16 %v382
        %v507 = vunpack.c.h.b16 %v382
        %v508 = vunpack.c.l.b16 %v383
        %v509 = vunpack.c.h.b16 %v383
        %v510 = vunpack.c.l.b16 %v384
        %v511 = vunpack.c.h.b16 %v384
        %v512 = vunpack.c.l.b16 %v385
        %v513 = vunpack.c.h.b16 %v385
        %v514 = vpack.c.b16 %v452, %v450
        %v515 = vpack.c.b16 %v453, %v451
        %v516 = vpack.c.b16 %v456, %v454
        %v517 = vpack.c.b16 %v457, %v455
        %v518 = vpack.c.b16 %v460, %v458
        %v519 = vpack.c.b16 %v461, %v459
        %v520 = vpack.c.b16 %v464, %v462
        %v521 = vpack.c.b16 %v465, %v463
        %v522 = vpack.c.b16 %v468, %v466
        %v523 = vpack.c.b16 %v469, %v467
        %v524 = vpack.c.b16 %v472, %v470
        %v525 = vpack.c.b16 %v473, %v471
        %v526 = vpack.c.b16 %v476, %v474
        %v527 = vpack.c.b16 %v477, %v475
        %v528 = vpack.c.b16 %v480, %v478
        %v529 = vpack.c.b16 %v481, %v479
        %v530 = vpack.c.b16 %v484, %v482
        %v531 = vpack.c.b16 %v485, %v483
        %v532 = vpack.c.b16 %v488, %v486
        %v533 = vpack.c.b16 %v489, %v487
        %v534 = vpack.c.b16 %v492, %v490
        %v535 = vpack.c.b16 %v493, %v491
        %v536 = vpack.c.b16 %v496, %v494
        %v537 = vpack.c.b16 %v497, %v495
        %v538 = vpack.c.b16 %v500, %v498
        %v539 = vpack.c.b16 %v501, %v499
        %v540 = vpack.c.b16 %v504, %v502
        %v541 = vpack.c.b16 %v505, %v503
        %v542 = vpack.c.b16 %v508, %v506
        %v543 = vpack.c.b16 %v509, %v507
        %v544 = vpack.c.b16 %v512, %v510
        %v545 = vpack.c.b16 %v513, %v511
        %v610 = vunpack.c.l.b16 %v386
        %v611 = vunpack.c.l.b16 %v387
        %v612 = vunpack.c.l.b16 %v388
        %v613 = vunpack.c.l.b16 %v389
        %v614 = vunpack.c.l.b16 %v390
        %v615 = vunpack.c.l.b16 %v391
        %v616 = vunpack.c.l.b16 %v392
        %v617 = vunpack.c.l.b16 %v393
        %v618 = vunpack.c.l.b16 %v394
        %v619 = vunpack.c.l.b16 %v395
        %v620 = vunpack.c.l.b16 %v396
        %v621 = vunpack.c.l.b16 %v397
        %v622 = vunpack.c.l.b16 %v398
        %v623 = vunpack.c.l.b16 %v399
        %v624 = vunpack.c.l.b16 %v400
        %v625 = vunpack.c.l.b16 %v401
        %v626 = vunpack.c.l.b16 %v402
        %v627 = vunpack.c.l.b16 %v403
        %v628 = vunpack.c.l.b16 %v404
        %v629 = vunpack.c.l.b16 %v405
        %v630 = vunpack.c.l.b16 %v406
        %v631 = vunpack.c.l.b16 %v407
        %v632 = vunpack.c.l.b16 %v408
        %v633 = vunpack.c.l.b16 %v409
        %v634 = vunpack.c.l.b16 %v410
        %v635 = vunpack.c.l.b16 %v411
        %v636 = vunpack.c.l.b16 %v412
        %v637 = vunpack.c.l.b16 %v413
        %v638 = vunpack.c.l.b16 %v414
        %v639 = vunpack.c.l.b16 %v415
        %v640 = vunpack.c.l.b16 %v416
        %v641 = vunpack.c.l.b16 %v417
        %v642 = vpack.c.b16 %v611, %v610
        %v643 = vpack.c.b16 %v613, %v612
        %v644 = vpack.c.b16 %v615, %v614
        %v645 = vpack.c.b16 %v617, %v616
        %v646 = vpack.c.b16 %v619, %v618
        %v647 = vpack.c.b16 %v621, %v620
        %v648 = vpack.c.b16 %v623, %v622
        %v649 = vpack.c.b16 %v625, %v624
        %v650 = vpack.c.b16 %v627, %v626
        %v651 = vpack.c.b16 %v629, %v628
        %v652 = vpack.c.b16 %v631, %v630
        %v653 = vpack.c.b16 %v633, %v632
        %v654 = vpack.c.b16 %v635, %v634
        %v655 = vpack.c.b16 %v637, %v636
        %v656 = vpack.c.b16 %v639, %v638
        %v657 = vpack.c.b16 %v641, %v640
        %674 = vmatprep.subr.bf16.mxu0 0
        %675 = vmatpush1.bf16.msra.mxu0 %v649
        %676 = vmatprep.subr.bf16.mxu0 0
        %677 = vmatpush1.bf16.msra.mxu0 %v648
        %678 = vmatprep.subr.bf16.mxu0 0
        %679 = vmatpush1.bf16.msra.mxu0 %v647
        %680 = vmatprep.subr.bf16.mxu0 0
        %681 = vmatpush1.bf16.msra.mxu0 %v646
        %682 = vmatprep.subr.bf16.mxu0 0
        %683 = vmatpush1.bf16.msra.mxu0 %v645
        %684 = vmatprep.subr.bf16.mxu0 0
        %685 = vmatpush1.bf16.msra.mxu0 %v644
        %686 = vmatprep.subr.bf16.mxu0 0
        %687 = vmatpush1.bf16.msra.mxu0 %v643
        %688 = vmatprep.subr.bf16.mxu0 0
        %689 = vmatpush1.bf16.msra.mxu0 %v642
        %690 = vmatprep.subr.bf16.mxu0 0
        %691 = vmatpush2.bf16.msra.mxu0 %v657
        %692 = vmatprep.subr.bf16.mxu0 0
        %693 = vmatpush2.bf16.msra.mxu0 %v656
        %694 = vmatprep.subr.bf16.mxu0 0
        %695 = vmatpush2.bf16.msra.mxu0 %v655
        %696 = vmatprep.subr.bf16.mxu0 0
        %697 = vmatpush2.bf16.msra.mxu0 %v654
        %698 = vmatprep.subr.bf16.mxu0 0
        %699 = vmatpush2.bf16.msra.mxu0 %v653
        %700 = vmatprep.subr.bf16.mxu0 0
        %701 = vmatpush2.bf16.msra.mxu0 %v652
        %702 = vmatprep.subr.bf16.mxu0 0
        %703 = vmatpush2.bf16.msra.mxu0 %v651
        %704 = vmatprep.subr.bf16.mxu0 0
        %705 = vmatpush2.bf16.msra.mxu0 %v650
        %706 = vmatprep.mubr.bf16.mxu0 %v515
        %707 = vmatmul.mubr.bf16.gmra.mxu0 %v514
        %v708 = vpop.f32.mrf.mxu0
        %v709 = vadd.f32 0.0, %v708
        %v710 = vpop.f32.mrf.mxu0
        %v711 = vpop.f32.mrf.mxu0
        %v712 = vadd.f32 0.0, %v711
        %v713 = vpop.f32.mrf.mxu0
        %714 = vmatprep.mubr.bf16.mxu0 %v517
        %715 = vmatmul.mubr.bf16.gmra.mxu0 %v516
        %v716 = vpop.f32.mrf.mxu0
        %v717 = vadd.f32 0.0, %v716
        %v718 = vpop.f32.mrf.mxu0
        %v719 = vpop.f32.mrf.mxu0
        %v720 = vadd.f32 0.0, %v719
        %v721 = vpop.f32.mrf.mxu0
        %722 = vmatprep.mubr.bf16.mxu0 %v519
        %723 = vmatmul.mubr.bf16.gmra.mxu0 %v518
        %v724 = vpop.f32.mrf.mxu0
        %v725 = vadd.f32 0.0, %v724
        %v726 = vpop.f32.mrf.mxu0
        %v727 = vpop.f32.mrf.mxu0
        %v728 = vadd.f32 0.0, %v727
        %v729 = vpop.f32.mrf.mxu0
        %730 = vmatprep.mubr.bf16.mxu0 %v521
        %731 = vmatmul.mubr.bf16.gmra.mxu0 %v520
        %v732 = vpop.f32.mrf.mxu0
        %v733 = vadd.f32 0.0, %v732
        %v734 = vpop.f32.mrf.mxu0
        %v735 = vpop.f32.mrf.mxu0
        %v736 = vadd.f32 0.0, %v735
        %v737 = vpop.f32.mrf.mxu0
        %738 = vmatprep.mubr.bf16.mxu0 %v523
        %739 = vmatmul.mubr.bf16.gmra.mxu0 %v522
        %v740 = vpop.f32.mrf.mxu0
        %v741 = vadd.f32 0.0, %v740
        %v742 = vpop.f32.mrf.mxu0
        %v743 = vpop.f32.mrf.mxu0
        %v744 = vadd.f32 0.0, %v743
        %v745 = vpop.f32.mrf.mxu0
        %746 = vmatprep.mubr.bf16.mxu0 %v525
        %747 = vmatmul.mubr.bf16.gmra.mxu0 %v524
        %v748 = vpop.f32.mrf.mxu0
        %v749 = vadd.f32 0.0, %v748
        %v750 = vpop.f32.mrf.mxu0
        %v751 = vpop.f32.mrf.mxu0
        %v752 = vadd.f32 0.0, %v751
        %v753 = vpop.f32.mrf.mxu0
        %754 = vmatprep.mubr.bf16.mxu0 %v527
        %755 = vmatmul.mubr.bf16.gmra.mxu0 %v526
        %v756 = vpop.f32.mrf.mxu0
        %v757 = vadd.f32 0.0, %v756
        %v758 = vpop.f32.mrf.mxu0
        %v759 = vpop.f32.mrf.mxu0
        %v760 = vadd.f32 0.0, %v759
        %v761 = vpop.f32.mrf.mxu0
        %762 = vmatprep.mubr.bf16.mxu0 %v529
        %763 = vmatmul.mubr.bf16.gmra.mxu0 %v528
        %v764 = vpop.f32.mrf.mxu0
        %v765 = vadd.f32 0.0, %v764
        %v766 = vpop.f32.mrf.mxu0
        %v767 = vpop.f32.mrf.mxu0
        %v768 = vadd.f32 0.0, %v767
        %v769 = vpop.f32.mrf.mxu0
        %770 = vmatprep.mubr.bf16.mxu0 %v531
        %771 = vmatmul.mubr.bf16.gmra.mxu0 %v530
        %v772 = vpop.f32.mrf.mxu0
        %v773 = vadd.f32 0.0, %v772
        %v774 = vpop.f32.mrf.mxu0
        %v775 = vpop.f32.mrf.mxu0
        %v776 = vadd.f32 0.0, %v775
        %v777 = vpop.f32.mrf.mxu0
        %778 = vmatprep.mubr.bf16.mxu0 %v533
        %779 = vmatmul.mubr.bf16.gmra.mxu0 %v532
        %v780 = vpop.f32.mrf.mxu0
        %v781 = vadd.f32 0.0, %v780
        %v782 = vpop.f32.mrf.mxu0
        %v783 = vpop.f32.mrf.mxu0
        %v784 = vadd.f32 0.0, %v783
        %v785 = vpop.f32.mrf.mxu0
        %786 = vmatprep.mubr.bf16.mxu0 %v535
        %787 = vmatmul.mubr.bf16.gmra.mxu0 %v534
        %v788 = vpop.f32.mrf.mxu0
        %v789 = vadd.f32 0.0, %v788
        %v790 = vpop.f32.mrf.mxu0
        %v791 = vpop.f32.mrf.mxu0
        %v792 = vadd.f32 0.0, %v791
        %v793 = vpop.f32.mrf.mxu0
        %794 = vmatprep.mubr.bf16.mxu0 %v537
        %795 = vmatmul.mubr.bf16.gmra.mxu0 %v536
        %v796 = vpop.f32.mrf.mxu0
        %v797 = vadd.f32 0.0, %v796
        %v798 = vpop.f32.mrf.mxu0
        %v799 = vpop.f32.mrf.mxu0
        %v800 = vadd.f32 0.0, %v799
        %v801 = vpop.f32.mrf.mxu0
        %802 = vmatprep.mubr.bf16.mxu0 %v539
        %803 = vmatmul.mubr.bf16.gmra.mxu0 %v538
        %v804 = vpop.f32.mrf.mxu0
        %v805 = vadd.f32 0.0, %v804
        %v806 = vpop.f32.mrf.mxu0
        %v807 = vpop.f32.mrf.mxu0
        %v808 = vadd.f32 0.0, %v807
        %v809 = vpop.f32.mrf.mxu0
        %810 = vmatprep.mubr.bf16.mxu0 %v541
        %811 = vmatmul.mubr.bf16.gmra.mxu0 %v540
        %v812 = vpop.f32.mrf.mxu0
        %v813 = vadd.f32 0.0, %v812
        %v814 = vpop.f32.mrf.mxu0
        %v815 = vpop.f32.mrf.mxu0
        %v816 = vadd.f32 0.0, %v815
        %v817 = vpop.f32.mrf.mxu0
        %818 = vmatprep.mubr.bf16.mxu0 %v543
        %819 = vmatmul.mubr.bf16.gmra.mxu0 %v542
        %v820 = vpop.f32.mrf.mxu0
        %v821 = vadd.f32 0.0, %v820
        %v822 = vpop.f32.mrf.mxu0
        %v823 = vpop.f32.mrf.mxu0
        %v824 = vadd.f32 0.0, %v823
        %v825 = vpop.f32.mrf.mxu0
        %826 = vmatprep.mubr.bf16.mxu0 %v545
        %827 = vmatmul.mubr.bf16.gmra.mxu0 %v544
        %v828 = vpop.f32.mrf.mxu0
        %v829 = vadd.f32 0.0, %v828
        %v830 = vpop.f32.mrf.mxu0
        %v831 = vpop.f32.mrf.mxu0
        %v832 = vadd.f32 0.0, %v831
        %v833 = vpop.f32.mrf.mxu0
        %834 = vdwg.mxu0
        %v835 = vadd.f32 %v322, %v709
        %v836 = vadd.f32 %v323, %v712
        %v837 = vadd.f32 %v324, %v717
        %v838 = vadd.f32 %v325, %v720
        %v839 = vadd.f32 %v326, %v725
        %v840 = vadd.f32 %v327, %v728
        %v841 = vadd.f32 %v328, %v733
        %v842 = vadd.f32 %v329, %v736
        %v843 = vadd.f32 %v330, %v741
        %v844 = vadd.f32 %v331, %v744
        %v845 = vadd.f32 %v332, %v749
        %v846 = vadd.f32 %v333, %v752
        %v847 = vadd.f32 %v334, %v757
        %v848 = vadd.f32 %v335, %v760
        %v849 = vadd.f32 %v336, %v765
        %v850 = vadd.f32 %v337, %v768
        %v851 = vadd.f32 %v338, %v773
        %v852 = vadd.f32 %v339, %v776
        %v853 = vadd.f32 %v340, %v781
        %v854 = vadd.f32 %v341, %v784
        %v855 = vadd.f32 %v342, %v789
        %v856 = vadd.f32 %v343, %v792
        %v857 = vadd.f32 %v344, %v797
        %v858 = vadd.f32 %v345, %v800
        %v859 = vadd.f32 %v346, %v805
        %v860 = vadd.f32 %v347, %v808
        %v861 = vadd.f32 %v348, %v813
        %v862 = vadd.f32 %v349, %v816
        %v863 = vadd.f32 %v350, %v821
        %v864 = vadd.f32 %v351, %v824
        %v865 = vadd.f32 %v352, %v829
        %v866 = vadd.f32 %v353, %v832
        %867 = vst [vmem:[#allocation2] sm:$0xff] %v835
        %868 = vst [vmem:[#allocation2 + $0x8] sm:$0xff] %v836
        %869 = vst [vmem:[#allocation2 + $0x10] sm:$0xff] %v837
        %870 = vst [vmem:[#allocation2 + $0x18] sm:$0xff] %v838
        %871 = vst [vmem:[#allocation2 + $0x20] sm:$0xff] %v839
        %872 = vst [vmem:[#allocation2 + $0x28] sm:$0xff] %v840
        %873 = vst [vmem:[#allocation2 + $0x30] sm:$0xff] %v841
        %874 = vst [vmem:[#allocation2 + $0x38] sm:$0xff] %v842
        %875 = vst [vmem:[#allocation2 + $0x40] sm:$0xff] %v843
        %876 = vst [vmem:[#allocation2 + $0x48] sm:$0xff] %v844
        %877 = vst [vmem:[#allocation2 + $0x50] sm:$0xff] %v845
        %878 = vst [vmem:[#allocation2 + $0x58] sm:$0xff] %v846
        %879 = vst [vmem:[#allocation2 + $0x60] sm:$0xff] %v847
        %880 = vst [vmem:[#allocation2 + $0x68] sm:$0xff] %v848
        %881 = vst [vmem:[#allocation2 + $0x70] sm:$0xff] %v849
        %882 = vst [vmem:[#allocation2 + $0x78] sm:$0xff] %v850
        %883 = vst [vmem:[#allocation2 + $0x80] sm:$0xff] %v851
        %884 = vst [vmem:[#allocation2 + $0x88] sm:$0xff] %v852
        %885 = vst [vmem:[#allocation2 + $0x90] sm:$0xff] %v853
        %886 = vst [vmem:[#allocation2 + $0x98] sm:$0xff] %v854
        %887 = vst [vmem:[#allocation2 + $0xa0] sm:$0xff] %v855
        %888 = vst [vmem:[#allocation2 + $0xa8] sm:$0xff] %v856
        %889 = vst [vmem:[#allocation2 + $0xb0] sm:$0xff] %v857
        %890 = vst [vmem:[#allocation2 + $0xb8] sm:$0xff] %v858
        %891 = vst [vmem:[#allocation2 + $0xc0] sm:$0xff] %v859
        %892 = vst [vmem:[#allocation2 + $0xc8] sm:$0xff] %v860
        %893 = vst [vmem:[#allocation2 + $0xd0] sm:$0xff] %v861
        %894 = vst [vmem:[#allocation2 + $0xd8] sm:$0xff] %v862
        %895 = vst [vmem:[#allocation2 + $0xe0] sm:$0xff] %v863
        %896 = vst [vmem:[#allocation2 + $0xe8] sm:$0xff] %v864
        %897 = vst [vmem:[#allocation2 + $0xf0] sm:$0xff] %v865
        %898 = vst [vmem:[#allocation2 + $0xf8] sm:$0xff] %v866
        // Predicated region
        $region45: #{tpu_custom_call.1} parent=27 // pred_check
          %p899 = pneg %p279
        $region46: #{tpu_custom_call.1} parent=27 // pred_check_branch
          %901 = sbr.rel (%p899) target = $region48
        $region47: #{tpu_custom_call.1} parent=27 // pred_region
          %v902 = vld [vmem:[#allocation2] sm:$0xff]
          %v903 = vld [vmem:[#allocation2 + $0x8] sm:$0xff]
          %v904 = vld [vmem:[#allocation2 + $0x10] sm:$0xff]
          %v905 = vld [vmem:[#allocation2 + $0x18] sm:$0xff]
          %v906 = vld [vmem:[#allocation2 + $0x20] sm:$0xff]
          %v907 = vld [vmem:[#allocation2 + $0x28] sm:$0xff]
          %v908 = vld [vmem:[#allocation2 + $0x30] sm:$0xff]
          %v909 = vld [vmem:[#allocation2 + $0x38] sm:$0xff]
          %v910 = vld [vmem:[#allocation2 + $0x40] sm:$0xff]
          %v911 = vld [vmem:[#allocation2 + $0x48] sm:$0xff]
          %v912 = vld [vmem:[#allocation2 + $0x50] sm:$0xff]
          %v913 = vld [vmem:[#allocation2 + $0x58] sm:$0xff]
          %v914 = vld [vmem:[#allocation2 + $0x60] sm:$0xff]
          %v915 = vld [vmem:[#allocation2 + $0x68] sm:$0xff]
          %v916 = vld [vmem:[#allocation2 + $0x70] sm:$0xff]
          %v917 = vld [vmem:[#allocation2 + $0x78] sm:$0xff]
          %v918 = vld [vmem:[#allocation2 + $0x80] sm:$0xff]
          %v919 = vld [vmem:[#allocation2 + $0x88] sm:$0xff]
          %v920 = vld [vmem:[#allocation2 + $0x90] sm:$0xff]
          %v921 = vld [vmem:[#allocation2 + $0x98] sm:$0xff]
          %v922 = vld [vmem:[#allocation2 + $0xa0] sm:$0xff]
          %v923 = vld [vmem:[#allocation2 + $0xa8] sm:$0xff]
          %v924 = vld [vmem:[#allocation2 + $0xb0] sm:$0xff]
          %v925 = vld [vmem:[#allocation2 + $0xb8] sm:$0xff]
          %v926 = vld [vmem:[#allocation2 + $0xc0] sm:$0xff]
          %v927 = vld [vmem:[#allocation2 + $0xc8] sm:$0xff]
          %v928 = vld [vmem:[#allocation2 + $0xd0] sm:$0xff]
          %v929 = vld [vmem:[#allocation2 + $0xd8] sm:$0xff]
          %v930 = vld [vmem:[#allocation2 + $0xe0] sm:$0xff]
          %v931 = vld [vmem:[#allocation2 + $0xe8] sm:$0xff]
          %v932 = vld [vmem:[#allocation2 + $0xf0] sm:$0xff]
          %v933 = vld [vmem:[#allocation2 + $0xf8] sm:$0xff]
          %934 = vst [vmem:[%s269] sm:$0xff] %v902
          %935 = vst [vmem:[%s269 + $0x8] sm:$0xff] %v903
          %936 = vst [vmem:[%s269 + $0x10] sm:$0xff] %v904
          %937 = vst [vmem:[%s269 + $0x18] sm:$0xff] %v905
          %938 = vst [vmem:[%s269 + $0x20] sm:$0xff] %v906
          %939 = vst [vmem:[%s269 + $0x28] sm:$0xff] %v907
          %940 = vst [vmem:[%s269 + $0x30] sm:$0xff] %v908
          %941 = vst [vmem:[%s269 + $0x38] sm:$0xff] %v909
          %942 = vst [vmem:[%s269 + $0x40] sm:$0xff] %v910
          %943 = vst [vmem:[%s269 + $0x48] sm:$0xff] %v911
          %944 = vst [vmem:[%s269 + $0x50] sm:$0xff] %v912
          %945 = vst [vmem:[%s269 + $0x58] sm:$0xff] %v913
          %946 = vst [vmem:[%s269 + $0x60] sm:$0xff] %v914
          %947 = vst [vmem:[%s269 + $0x68] sm:$0xff] %v915
          %948 = vst [vmem:[%s269 + $0x70] sm:$0xff] %v916
          %949 = vst [vmem:[%s269 + $0x78] sm:$0xff] %v917
          %950 = vst [vmem:[%s269 + $0x80] sm:$0xff] %v918
          %951 = vst [vmem:[%s269 + $0x88] sm:$0xff] %v919
          %952 = vst [vmem:[%s269 + $0x90] sm:$0xff] %v920
          %953 = vst [vmem:[%s269 + $0x98] sm:$0xff] %v921
          %954 = vst [vmem:[%s269 + $0xa0] sm:$0xff] %v922
          %955 = vst [vmem:[%s269 + $0xa8] sm:$0xff] %v923
          %956 = vst [vmem:[%s269 + $0xb0] sm:$0xff] %v924
          %957 = vst [vmem:[%s269 + $0xb8] sm:$0xff] %v925
          %958 = vst [vmem:[%s269 + $0xc0] sm:$0xff] %v926
          %959 = vst [vmem:[%s269 + $0xc8] sm:$0xff] %v927
          %960 = vst [vmem:[%s269 + $0xd0] sm:$0xff] %v928
          %961 = vst [vmem:[%s269 + $0xd8] sm:$0xff] %v929
          %962 = vst [vmem:[%s269 + $0xe0] sm:$0xff] %v930
          %963 = vst [vmem:[%s269 + $0xe8] sm:$0xff] %v931
          %964 = vst [vmem:[%s269 + $0xf0] sm:$0xff] %v932
          %965 = vst [vmem:[%s269 + $0xf8] sm:$0xff] %v933
          %v966 = vld [vmem:[#allocation3] sm:$0x1]
          %v967 = vadd.f32 %v902, %v903
          %v968 = vadd.f32 %v967, %v904
          %v969 = vadd.f32 %v968, %v905
          %v970 = vadd.f32 %v969, %v906
          %v971 = vadd.f32 %v970, %v907
          %v972 = vadd.f32 %v971, %v908
          %v973 = vadd.f32 %v972, %v909
          %v974 = vadd.f32 %v973, %v910
          %v975 = vadd.f32 %v974, %v911
          %v976 = vadd.f32 %v975, %v912
          %v977 = vadd.f32 %v976, %v913
          %v978 = vadd.f32 %v977, %v914
          %v979 = vadd.f32 %v978, %v915
          %v980 = vadd.f32 %v979, %v916
          %v981 = vadd.f32 %v980, %v917
          %v982 = vadd.f32 %v981, %v918
          %v983 = vadd.f32 %v982, %v919
          %v984 = vadd.f32 %v983, %v920
          %v985 = vadd.f32 %v984, %v921
          %v986 = vadd.f32 %v985, %v922
          %v987 = vadd.f32 %v986, %v923
          %v988 = vadd.f32 %v987, %v924
          %v989 = vadd.f32 %v988, %v925
          %v990 = vadd.f32 %v989, %v926
          %v991 = vadd.f32 %v990, %v927
          %v992 = vadd.f32 %v991, %v928
          %v993 = vadd.f32 %v992, %v929
          %v994 = vadd.f32 %v993, %v930
          %v995 = vadd.f32 %v994, %v931
          %v996 = vadd.f32 %v995, %v932
          %v997 = vadd.f32 %v996, %v933
          %v998 = vrot.slane %v997, 4
          %v999 = vadd.f32 %v997, %v998
          %v1000 = vrot.slane %v999, 2
          %v1001 = vadd.f32 %v999, %v1000
          %v1002 = vrot.slane %v1001, 1
          %v1003 = vadd.f32 %v1001, %v1002
          %v1004 = vadd.f32 %v966, %v1003
          %1005 = vst [vmem:[#allocation3] sm:$0x1] %v1004
          %v1006 = vld [vmem:[#allocation4] sm:$0x1]
          %v1007 = vmul.f32 %v902, %v902
          %v1008 = vmul.f32 %v903, %v903
          %v1009 = vmul.f32 %v904, %v904
          %v1010 = vmul.f32 %v905, %v905
          %v1011 = vmul.f32 %v906, %v906
          %v1012 = vmul.f32 %v907, %v907
          %v1013 = vmul.f32 %v908, %v908
          %v1014 = vmul.f32 %v909, %v909
          %v1015 = vmul.f32 %v910, %v910
          %v1016 = vmul.f32 %v911, %v911
          %v1017 = vmul.f32 %v912, %v912
          %v1018 = vmul.f32 %v913, %v913
          %v1019 = vmul.f32 %v914, %v914
          %v1020 = vmul.f32 %v915, %v915
          %v1021 = vmul.f32 %v916, %v916
          %v1022 = vmul.f32 %v917, %v917
          %v1023 = vmul.f32 %v918, %v918
          %v1024 = vmul.f32 %v919, %v919
          %v1025 = vmul.f32 %v920, %v920
          %v1026 = vmul.f32 %v921, %v921
          %v1027 = vmul.f32 %v922, %v922
          %v1028 = vmul.f32 %v923, %v923
          %v1029 = vmul.f32 %v924, %v924
          %v1030 = vmul.f32 %v925, %v925
          %v1031 = vmul.f32 %v926, %v926
          %v1032 = vmul.f32 %v927, %v927
          %v1033 = vmul.f32 %v928, %v928
          %v1034 = vmul.f32 %v929, %v929
          %v1035 = vmul.f32 %v930, %v930
          %v1036 = vmul.f32 %v931, %v931
          %v1037 = vmul.f32 %v932, %v932
          %v1038 = vmul.f32 %v933, %v933
          %v1039 = vadd.f32 %v1007, %v1008
          %v1040 = vadd.f32 %v1039, %v1009
          %v1041 = vadd.f32 %v1040, %v1010
          %v1042 = vadd.f32 %v1041, %v1011
          %v1043 = vadd.f32 %v1042, %v1012
          %v1044 = vadd.f32 %v1043, %v1013
          %v1045 = vadd.f32 %v1044, %v1014
          %v1046 = vadd.f32 %v1045, %v1015
          %v1047 = vadd.f32 %v1046, %v1016
          %v1048 = vadd.f32 %v1047, %v1017
          %v1049 = vadd.f32 %v1048, %v1018
          %v1050 = vadd.f32 %v1049, %v1019
          %v1051 = vadd.f32 %v1050, %v1020
          %v1052 = vadd.f32 %v1051, %v1021
          %v1053 = vadd.f32 %v1052, %v1022
          %v1054 = vadd.f32 %v1053, %v1023
          %v1055 = vadd.f32 %v1054, %v1024
          %v1056 = vadd.f32 %v1055, %v1025
          %v1057 = vadd.f32 %v1056, %v1026
          %v1058 = vadd.f32 %v1057, %v1027
          %v1059 = vadd.f32 %v1058, %v1028
          %v1060 = vadd.f32 %v1059, %v1029
          %v1061 = vadd.f32 %v1060, %v1030
          %v1062 = vadd.f32 %v1061, %v1031
          %v1063 = vadd.f32 %v1062, %v1032
          %v1064 = vadd.f32 %v1063, %v1033
          %v1065 = vadd.f32 %v1064, %v1034
          %v1066 = vadd.f32 %v1065, %v1035
          %v1067 = vadd.f32 %v1066, %v1036
          %v1068 = vadd.f32 %v1067, %v1037
          %v1069 = vadd.f32 %v1068, %v1038
          %v1070 = vrot.slane %v1069, 4
          %v1071 = vadd.f32 %v1069, %v1070
          %v1072 = vrot.slane %v1071, 2
          %v1073 = vadd.f32 %v1071, %v1072
          %v1074 = vrot.slane %v1073, 1
          %v1075 = vadd.f32 %v1073, %v1074
          %v1076 = vadd.f32 %v1006, %v1075
          %1077 = vst [vmem:[#allocation4] sm:$0x1] %v1076
        $region48: #{tpu_custom_call.1} parent=27 // pred_fallthru
          _
        %p1078 = scmp.eq.s32.totalorder %s30, 17
        %p1079 = pnand %p1078, %p279
        %p1080 = pneg %p1079
        // Predicated region
        $region49: #{tpu_custom_call.1} parent=27 // pred_check
          _
        $region50: #{tpu_custom_call.1} parent=27 // pred_check_branch
          %1082 = sbr.rel (%p1079) target = $region52
        $region51: #{tpu_custom_call.1} parent=27 // pred_region
          %v1083 = vld [vmem:[#allocation3] sm:$0x1]
          %1084 = vst [vmem:[#allocation11] sm:$0x1] %v1083
          %v1085 = vld [vmem:[#allocation4] sm:$0x1]
          %1086 = vst [vmem:[#allocation13] sm:$0x1] %v1085
        $region52: #{tpu_custom_call.1} parent=27 // pred_fallthru
          _
        %s1087 = sand.u32 %s109, 1
        %s1088 = scalar_lea.sflag [#allocation7], %s1087
        %s1089 = sand.u32 %s109, 1
        %s1090 = smul.addr %s1089, 256
        %s1091 = scalar_lea.vmem [#allocation10], %s1090
        // Predicated region
        $region53: #{tpu_custom_call.1} parent=27 // pred_check
          %p1092 = pneg %p119
        $region54: #{tpu_custom_call.1} parent=27 // pred_check_branch
          %1094 = sbr.rel (%p1092) target = $region56
        $region55: #{tpu_custom_call.1} parent=27 // pred_region
          %s1095 = smul.u32 32, %s30
          %s1097 = ssub.s32 4096, 4096
          %1098 = vsyncadd %s1088, %s1097
          %s1099 = sadd.s32 %s29, %s1095
          %s1100 = smul.addr %s1099, 128
          %s1101 = scalar_lea.hbm %s2, %s1100
          %s1102 = sshll.u32 %s1091, 4
          %s1103 = int_to_ptr.vmem [resolvable:$true] %s1102
          %1108 = dma.vmem_to_hbm [thread:$0]  %s1103, 4096, %s1101, %s1088, 128, 128, 8
        $region56: #{tpu_custom_call.1} parent=27 // pred_fallthru
          _
        // Predicated region
        $region57: #{tpu_custom_call.1} parent=27 // pred_check
          %p1109 = pneg %p145
        $region58: #{tpu_custom_call.1} parent=27 // pred_check_branch
          %1111 = sbr.rel (%p1109) target = $region60
        $region59: #{tpu_custom_call.1} parent=27 // pred_region
          %s1113 = ssub.s32 16, 16
          %1114 = vsyncadd [#allocation12], %s1113
          %s1115 = smul.addr %s29, 16
          %s1116 = scalar_lea.hbm %s3, %s1115
          %s1118 = sshll.u32 [#allocation11], 4
          %s1119 = int_to_ptr.vmem [resolvable:$true] %s1118
          %1121 = dma.vmem_to_hbm [thread:$0]  %s1119, 16, %s1116, [#allocation12]
        $region60: #{tpu_custom_call.1} parent=27 // pred_fallthru
          _
        // Predicated region
        $region61: #{tpu_custom_call.1} parent=27 // pred_check
          %p1122 = pneg %p171
        $region62: #{tpu_custom_call.1} parent=27 // pred_check_branch
          %1124 = sbr.rel (%p1122) target = $region64
        $region63: #{tpu_custom_call.1} parent=27 // pred_region
          %s1126 = ssub.s32 16, 16
          %1127 = vsyncadd [#allocation12], %s1126
          %s1128 = smul.addr %s29, 16
          %s1129 = scalar_lea.hbm %s4, %s1128
          %s1131 = sshll.u32 [#allocation13], 4
          %s1132 = int_to_ptr.vmem [resolvable:$true] %s1131
          %1134 = dma.vmem_to_hbm [thread:$0]  %s1132, 16, %s1129, [#allocation12]
        $region64: #{tpu_custom_call.1} parent=27 // pred_fallthru
          _
        // Predicated region
        $region65: #{tpu_custom_call.1} parent=27 // pred_check
          %p1135 = pneg %p145
        $region66: #{tpu_custom_call.1} parent=27 // pred_check_branch
          %1137 = sbr.rel (%p1135) target = $region68
        $region67: #{tpu_custom_call.1} parent=27 // pred_region
          %1138 = dma.done [#allocation12], 16
        $region68: #{tpu_custom_call.1} parent=27 // pred_fallthru
          _
        // Predicated region
        $region69: #{tpu_custom_call.1} parent=27 // pred_check
          %p1139 = pneg %p171
        $region70: #{tpu_custom_call.1} parent=27 // pred_check_branch
          %1141 = sbr.rel (%p1139) target = $region72
        $region71: #{tpu_custom_call.1} parent=27 // pred_region
          %1142 = dma.done [#allocation12], 16
        $region72: #{tpu_custom_call.1} parent=27 // pred_fallthru
          _
      $region28: #{tpu_custom_call.1} parent=5 // pred_fallthru
        _
      %p1143 = scmp.le.s32.totalorder 2, %s19
      // Predicated region
      $region73: #{tpu_custom_call.1} parent=5 // pred_check
        %p1144 = pneg %p1143
      $region74: #{tpu_custom_call.1} parent=5 // pred_check_branch
        %1146 = sbr.rel (%p1144) target = $region76
      $region75: #{tpu_custom_call.1} parent=5 // pred_region
        %s1147 = ssub.s32 %s19, 2
        // Predicated region
        $region77: #{tpu_custom_call.1} parent=75 // pred_check
          %p1148 = pneg %p125
        $region78: #{tpu_custom_call.1} parent=75 // pred_check_branch
          %1150 = sbr.rel (%p1148) target = $region80
        $region79: #{tpu_custom_call.1} parent=75 // pred_region
          %s1151 = sand.u32 %s110, 1
          %s1152 = scalar_lea.sflag [#allocation7], %s1151
          %s1153 = sand.u32 %s110, 1
          %s1154 = smul.addr %s1153, 256
          %s1155 = scalar_lea.vmem [#allocation10], %s1154
          %1156 = dma.done %s1152, 4096
        $region80: #{tpu_custom_call.1} parent=75 // pred_fallthru
          _
      $region76: #{tpu_custom_call.1} parent=5 // pred_fallthru
        _
    $region6: #{tpu_custom_call.1} parent=1 // loop_footer
      %s23 = sadd.s32 1, %s19
    $region7: #{tpu_custom_call.1} parent=1 // loop_footer_branch
      %18 = sbr.rel target = $region3
    $region8: #{tpu_custom_call.1} parent=1 // loop_exit
      _
    %1157 = vsyncpa [#allocation6], 1
    %s1158 = scalar_lea.sflag [#allocation6], 1
    %1159 = vsyncpa %s1158, 1
    %1160 = vsyncpa [#allocation9], 1
    %1161 = vsyncpa [#allocation7], 1
    %s1162 = scalar_lea.sflag [#allocation7], 1
    %1163 = vsyncpa %s1162, 1
    %1164 = vsyncpa [#allocation12], 1

</llo_original>
